<compile_context>
chip_gen: v7x
topology: tpu7x:2x2x1
jax: 0.10.0
libtpu: 0.0.40
codegen_flags: <defaults>
</compile_context>

<pallas_src>
import functools

import jax
import jax.numpy as jnp
from jax.experimental import pallas as pl
from jax.experimental.pallas import tpu as pltpu

EPS = 1e-5  # PyTorch LayerNorm default


def _layer_norm(h, gamma, beta):
    # gamma/beta arrive as (1, dim); broadcast against (rows, dim). f32 math.
    mean = jnp.mean(h, axis=-1, keepdims=True)
    var = jnp.mean((h - mean) ** 2, axis=-1, keepdims=True)
    return (h - mean) * jax.lax.rsqrt(var + EPS) * gamma + beta


def transformer_block_kernel(
    xf_ref,                          # (N, D) f32 full sequence of this batch row
    g1_ref, be1_ref,                 # LN1 gamma / beta               (1, D)
    wq_ref, bq_ref,                  # per-head Q: (H, D, E) bf16 scaled, (H, 1, E)
    wk_ref, bk_ref,                  # K: (D, D) bf16, (1, D)
    wv_ref, bv_ref,                  # V: (D, D) bf16, (1, D)
    g2_ref, be2_ref,                 # LN2 gamma / beta               (1, D)
    w1_ref, b1_ref,                  # MLP in : (D, F) bf16, (1, F)
    g3_ref, be3_ref,                 # LN3 gamma / beta               (1, F)
    w2_ref, b2_ref,                  # MLP out: (F, D) bf16, (1, D)
    o_ref,                           # (TQ, D) f32 output tile
    h1_ref,                          # VMEM (N, D) bf16   : cached LN1(x)
    kh_ref, vh_ref,                  # VMEM (H, N, E) bf16: cached K / V (head-major)
    attn_ref,                        # VMEM (TQ, D) f32   : attention assembly
    *, num_heads,
):
    f32 = jnp.float32
    bf16 = jnp.bfloat16
    N, D = xf_ref.shape
    TQ = o_ref.shape[0]
    E = D // num_heads
    qt = pl.program_id(1)

    # ---- once per batch row: full-sequence LN1 + K/V projections -> caches ----
    @pl.when(qt == 0)
    def _fill_caches():
        h1 = _layer_norm(xf_ref[...], g1_ref[...], be1_ref[...]).astype(bf16)
        h1_ref[...] = h1
        # Separate K / V matmuls, cast to bf16 immediately (no (N, 2D) f32 temp).
        k = (jnp.dot(h1, wk_ref[...], preferred_element_type=f32)
             + bk_ref[...]).astype(bf16)
        v = (jnp.dot(h1, wv_ref[...], preferred_element_type=f32)
             + bv_ref[...]).astype(bf16)
        # Head-major re-layout done once per row; per-tile reads below are
        # dense leading-index loads (no per-tile lane slicing).
        for h in range(num_heads):
            sl = slice(h * E, (h + 1) * E)
            kh_ref[h] = k[:, sl]
            vh_ref[h] = v[:, sl]

    row0 = pl.multiple_of(qt * TQ, TQ)
    xt = xf_ref[pl.ds(row0, TQ), :]          # residual rows (f32)
    h1t = h1_ref[pl.ds(row0, TQ), :]         # cached LN1 rows (bf16), no re-LN

    # ---- attention branch: x + attention(ln1(x)) (dropout = identity) --------
    # Softmax scale sqrt(emb_dim) is pre-folded into wq/bq.
    for h in range(num_heads):               # static unroll; H is small
        q_h = (jnp.dot(h1t, wq_ref[h], preferred_element_type=f32)
               + bq_ref[h]).astype(bf16)                          # (TQ, E)
        s = jax.lax.dot_general(q_h, kh_ref[h], (((1,), (1,)), ((), ())),
                                preferred_element_type=f32)       # (TQ, N)
        s = s - jnp.max(s, axis=-1, keepdims=True)
        p = jnp.exp(s)
        p = p * pl.reciprocal(jnp.sum(p, axis=-1, keepdims=True), approx=True)
        attn_ref[:, h * E:(h + 1) * E] = jnp.dot(
            p.astype(bf16), vh_ref[h], preferred_element_type=f32)

    x1 = xt + attn_ref[...]                  # residual

    # ---- MLP branch (no residual; Linear -> Dropout -> LN -> ReLU -> Linear) --
    h2 = _layer_norm(x1, g2_ref[...], be2_ref[...]).astype(bf16)
    f = jnp.dot(h2, w1_ref[...], preferred_element_type=f32) + b1_ref[...]
    f = _layer_norm(f, g3_ref[...], be3_ref[...])
    f = jnp.maximum(f, 0.0).astype(bf16)     # ReLU
    o_ref[...] = jnp.dot(f, w2_ref[...], preferred_element_type=f32) + b2_ref[...]


def transformer_block(x, prep, num_heads, *, seq_block=256):
    """prep = prepare_params(...) output. Grid = (batch, query-row tiles)."""
    B, N, D = x.shape
    Fdim = prep["w1"].shape[1]
    assert D % num_heads == 0, "emb_dim must be divisible by num_heads"
    H = num_heads
    E = D // H
    TQ = min(N, seq_block)
    assert N % TQ == 0, "seq_len must be a multiple of the query tile"
    NQ = N // TQ

    def rep(shape):  # grid-invariant parameter block
        nd = len(shape)
        return pl.BlockSpec(shape, lambda b, qt: (0,) * nd)

    kernel = functools.partial(transformer_block_kernel, num_heads=num_heads)

    return pl.pallas_call(
        kernel,
        out_shape=jax.ShapeDtypeStruct((B, N, D), jnp.float32),
        grid=(B, NQ),
        in_specs=[
            pl.BlockSpec((pl.Squeezed(), N, D), lambda b, qt: (b, 0, 0)),  # x (full seq)
            rep((1, D)), rep((1, D)),            # ln1 gamma/beta
            rep((H, D, E)), rep((H, 1, E)),      # wq per-head (scaled, bf16), bq
            rep((D, D)), rep((1, D)),            # wk (bf16), bk
            rep((D, D)), rep((1, D)),            # wv (bf16), bv
            rep((1, D)), rep((1, D)),            # ln2 gamma/beta
            rep((D, Fdim)), rep((1, Fdim)),      # w1 (bf16), b1
            rep((1, Fdim)), rep((1, Fdim)),      # ln3 gamma/beta
            rep((Fdim, D)), rep((1, D)),         # w2 (bf16), b2
        ],
        out_specs=pl.BlockSpec((pl.Squeezed(), TQ, D), lambda b, qt: (b, qt, 0)),
        scratch_shapes=[
            pltpu.VMEM((N, D), jnp.bfloat16),    # cached LN1(x)
            pltpu.VMEM((H, N, E), jnp.bfloat16), # cached K (head-major)
            pltpu.VMEM((H, N, E), jnp.bfloat16), # cached V (head-major)
            pltpu.VMEM((TQ, D), jnp.float32),    # attention output assembly
        ],
        compiler_params=pltpu.CompilerParams(
            dimension_semantics=("parallel", "arbitrary"),
            vmem_limit_bytes=48 * 1024 * 1024),
    )(
        x,
        prep["g1"], prep["be1"],
        prep["wq_h"], prep["bq_h"],
        prep["wk"], prep["bk"],
        prep["wv"], prep["bv"],
        prep["g2"], prep["be2"],
        prep["w1"], prep["b1"],
        prep["g3"], prep["be3"],
        prep["w2"], prep["b2"],
    )


def prepare_params(p, emb_dim, num_heads):
    """Host/trace-time prep: fold sqrt(emb_dim) into Q, split Q per head,
    bf16 weights (biases stay f32)."""
    # PyTorch: score = q @ k^T / sqrt(1/emb_dim) == q @ k^T * sqrt(emb_dim)
    scale = jnp.sqrt(jnp.float32(emb_dim))
    bf = jnp.bfloat16
    H = num_heads
    E = emb_dim // H
    wq_h = (p["wq"] * scale).reshape(emb_dim, H, E).transpose(1, 0, 2).astype(bf)
    bq_h = (p["bq"] * scale).reshape(1, H, E).transpose(1, 0, 2)
    return {
        "g1": p["g1"], "be1": p["be1"],
        "wq_h": wq_h, "bq_h": bq_h,
        "wk": p["wk"].astype(bf), "bk": p["bk"],
        "wv": p["wv"].astype(bf), "bv": p["bv"],
        "g2": p["g2"], "be2": p["be2"],
        "w1": p["w1"].astype(bf), "b1": p["b1"],
        "g3": p["g3"], "be3": p["be3"],
        "w2": p["w2"].astype(bf), "b2": p["b2"],
    }


def kernel_reference(x, prep, num_heads):
    """Pure-JAX mirror of the forward using the same bf16-operand / f32-accumulate
    mixed-precision convention as the kernel (PyTorch math, eval mode)."""
    def ln(h, g, b):
        m = h.mean(-1, keepdims=True)
        v = ((h - m) ** 2).mean(-1, keepdims=True)
        return (h - m) * jax.lax.rsqrt(v + EPS) * g + b

    B, N, D = x.shape
    E = D // num_heads
    bf = jnp.bfloat16
    h1 = ln(x, prep["g1"], prep["be1"]).astype(bf)
    q = jnp.einsum("bnd,hde->bhne", h1, prep["wq_h"],
                   preferred_element_type=jnp.float32) + prep["bq_h"][None]
    k = (jnp.einsum("bnd,de->bne", h1, prep["wk"],
                    preferred_element_type=jnp.float32) + prep["bk"]).astype(bf)
    v = (jnp.einsum("bnd,de->bne", h1, prep["wv"],
                    preferred_element_type=jnp.float32) + prep["bv"]).astype(bf)
    qb = q.astype(bf)                                   # (B, H, N, E)
    kb = k.reshape(B, N, num_heads, E)
    vb = v.reshape(B, N, num_heads, E)
    s = jnp.einsum("bhqe,bkhe->bhqk", qb, kb, preferred_element_type=jnp.float32)
    p = jax.nn.softmax(s, axis=-1).astype(bf)
    attn = jnp.einsum("bhqk,bkhe->bqhe", p, vb,
                      preferred_element_type=jnp.float32).reshape(B, N, D)
    x1 = x + attn
    h2 = ln(x1, prep["g2"], prep["be2"]).astype(bf)
    f = jnp.einsum("bnd,df->bnf", h2, prep["w1"],
                   preferred_element_type=jnp.float32) + prep["b1"]
    f = ln(f, prep["g3"], prep["be3"])
    f = jnp.maximum(f, 0.0).astype(bf)
    return jnp.einsum("bnf,fd->bnd", f, prep["w2"],
                      preferred_element_type=jnp.float32) + prep["b2"]


def init_params(key, emb_dim, ffn_dim):
    ks = jax.random.split(key, 12)
    rnd = lambda k, shape, s=0.1: (s * jax.random.normal(k, shape)).astype(jnp.float32)
    return {
        "g1": jnp.ones((1, emb_dim), jnp.float32) + rnd(ks[0], (1, emb_dim), 0.02),
        "be1": rnd(ks[1], (1, emb_dim), 0.02),
        "wq": rnd(ks[2], (emb_dim, emb_dim)),
        "bq": rnd(ks[3], (1, emb_dim), 0.02),
        "wk": rnd(ks[4], (emb_dim, emb_dim)),
        "bk": rnd(ks[5], (1, emb_dim), 0.02),
        "wv": rnd(ks[6], (emb_dim, emb_dim)),
        "bv": rnd(ks[7], (1, emb_dim), 0.02),
        "g2": jnp.ones((1, emb_dim), jnp.float32) + rnd(ks[8], (1, emb_dim), 0.02),
        "be2": rnd(ks[9], (1, emb_dim), 0.02),
        "w1": rnd(ks[10], (emb_dim, ffn_dim)),
        "b1": rnd(ks[11], (1, ffn_dim), 0.02),
        "g3": jnp.ones((1, ffn_dim), jnp.float32),
        "be3": jnp.zeros((1, ffn_dim), jnp.float32),
        "w2": rnd(jax.random.fold_in(key, 100), (ffn_dim, emb_dim)),
        "b2": rnd(jax.random.fold_in(key, 101), (1, emb_dim), 0.02),
    }


if __name__ == "__main__":
    B, N, D, H, F = 2, 8, 32, 4, 64   # batch, seq, emb_dim, num_heads, ffn_dim

    key = jax.random.PRNGKey(0)
    kx, kp = jax.random.split(key)
    x = jax.random.normal(kx, (B, N, D), dtype=jnp.float32)
    params = init_params(kp, D, F)
    prep = prepare_params(params, D, H)

    out = transformer_block(x, prep, num_heads=H)
    out = jax.block_until_ready(out)

    ref = kernel_reference(x, prep, num_heads=H)
    assert out.shape == (B, N, D)
    max_err = jnp.max(jnp.abs(out - ref))
    assert jnp.allclose(out, ref, atol=1e-2, rtol=1e-2), f"max abs err = {max_err}"

    print("KERNEL_OK")
</pallas_src>

<mosaic_0001>
module attributes {stable_mosaic.version = 11 : i64} {
  func.func @transformer_block_kernel(%arg0: i32, %arg1: i32, %arg2: memref<1x8x32xf32, #tpu.memory_space<vmem>>, %arg3: memref<1x32xf32, #tpu.memory_space<vmem>>, %arg4: memref<1x32xf32, #tpu.memory_space<vmem>>, %arg5: memref<4x32x8xbf16, #tpu.memory_space<vmem>>, %arg6: memref<4x1x8xf32, #tpu.memory_space<vmem>>, %arg7: memref<32x32xbf16, #tpu.memory_space<vmem>>, %arg8: memref<1x32xf32, #tpu.memory_space<vmem>>, %arg9: memref<32x32xbf16, #tpu.memory_space<vmem>>, %arg10: memref<1x32xf32, #tpu.memory_space<vmem>>, %arg11: memref<1x32xf32, #tpu.memory_space<vmem>>, %arg12: memref<1x32xf32, #tpu.memory_space<vmem>>, %arg13: memref<32x64xbf16, #tpu.memory_space<vmem>>, %arg14: memref<1x64xf32, #tpu.memory_space<vmem>>, %arg15: memref<1x64xf32, #tpu.memory_space<vmem>>, %arg16: memref<1x64xf32, #tpu.memory_space<vmem>>, %arg17: memref<64x32xbf16, #tpu.memory_space<vmem>>, %arg18: memref<1x32xf32, #tpu.memory_space<vmem>>, %arg19: memref<1x8x32xf32, #tpu.memory_space<vmem>>, %arg20: memref<8x32xbf16, #tpu.memory_space<vmem>>, %arg21: memref<4x8x8xbf16, #tpu.memory_space<vmem>>, %arg22: memref<4x8x8xbf16, #tpu.memory_space<vmem>>, %arg23: memref<8x32xf32, #tpu.memory_space<vmem>>) attributes {dimension_semantics = [#tpu.dimension_semantics<parallel>, #tpu.dimension_semantics<arbitrary>], iteration_bounds = array<i64: 2, 1>, scalar_prefetch = 0 : i64, scratch_operands = 4 : i64, tpu.core_type = #tpu.core_type<tc>, window_params = [{transform_indices = @transform_0, window_bounds = array<i64: 1, 8, 32>}, {pipeline_mode = #tpu.pipeline_mode<synchronous>, transform_indices = @transform_1, window_bounds = array<i64: 1, 32>}, {pipeline_mode = #tpu.pipeline_mode<synchronous>, transform_indices = @transform_2, window_bounds = array<i64: 1, 32>}, {pipeline_mode = #tpu.pipeline_mode<synchronous>, transform_indices = @transform_3, window_bounds = array<i64: 4, 32, 8>}, {pipeline_mode = #tpu.pipeline_mode<synchronous>, transform_indices = @transform_4, window_bounds = array<i64: 4, 1, 8>}, {pipeline_mode = #tpu.pipeline_mode<synchronous>, transform_indices = @transform_5, window_bounds = array<i64: 32, 32>}, {pipeline_mode = #tpu.pipeline_mode<synchronous>, transform_indices = @transform_6, window_bounds = array<i64: 1, 32>}, {pipeline_mode = #tpu.pipeline_mode<synchronous>, transform_indices = @transform_7, window_bounds = array<i64: 32, 32>}, {pipeline_mode = #tpu.pipeline_mode<synchronous>, transform_indices = @transform_8, window_bounds = array<i64: 1, 32>}, {pipeline_mode = #tpu.pipeline_mode<synchronous>, transform_indices = @transform_9, window_bounds = array<i64: 1, 32>}, {pipeline_mode = #tpu.pipeline_mode<synchronous>, transform_indices = @transform_10, window_bounds = array<i64: 1, 32>}, {pipeline_mode = #tpu.pipeline_mode<synchronous>, transform_indices = @transform_11, window_bounds = array<i64: 32, 64>}, {pipeline_mode = #tpu.pipeline_mode<synchronous>, transform_indices = @transform_12, window_bounds = array<i64: 1, 64>}, {pipeline_mode = #tpu.pipeline_mode<synchronous>, transform_indices = @transform_13, window_bounds = array<i64: 1, 64>}, {pipeline_mode = #tpu.pipeline_mode<synchronous>, transform_indices = @transform_14, window_bounds = array<i64: 1, 64>}, {pipeline_mode = #tpu.pipeline_mode<synchronous>, transform_indices = @transform_15, window_bounds = array<i64: 64, 32>}, {pipeline_mode = #tpu.pipeline_mode<synchronous>, transform_indices = @transform_16, window_bounds = array<i64: 1, 32>}, {transform_indices = @transform_17, window_bounds = array<i64: 1, 8, 32>}]} {
    %c0_i32 = arith.constant 0 : i32
    %0 = arith.cmpi eq, %arg1, %c0_i32 : i32
    %1 = arith.extui %0 : i1 to i32
    %c0_i32_0 = arith.constant 0 : i32
    %2 = arith.cmpi ne, %1, %c0_i32_0 : i32
    scf.if %2 {
      %c0_106 = arith.constant 0 : index
      %c0_107 = arith.constant 0 : index
      %c0_108 = arith.constant 0 : index
      %181 = vector.load %arg2[%c0_106, %c0_107, %c0_108] : memref<1x8x32xf32, #tpu.memory_space<vmem>>, vector<1x8x32xf32>
      %182 = vector.shape_cast %181 : vector<1x8x32xf32> to vector<8x32xf32>
      %c0_109 = arith.constant 0 : index
      %c0_110 = arith.constant 0 : index
      %183 = vector.load %arg3[%c0_109, %c0_110] : memref<1x32xf32, #tpu.memory_space<vmem>>, vector<1x32xf32>
      %c0_111 = arith.constant 0 : index
      %c0_112 = arith.constant 0 : index
      %184 = vector.load %arg4[%c0_111, %c0_112] : memref<1x32xf32, #tpu.memory_space<vmem>>, vector<1x32xf32>
      %cst_113 = arith.constant dense<0.000000e+00> : vector<8xf32>
      %185 = vector.multi_reduction <add>, %182, %cst_113 [1] : vector<8x32xf32> to vector<8xf32>
      %186 = vector.shape_cast %185 : vector<8xf32> to vector<8x1xf32>
      %cst_114 = arith.constant 3.200000e+01 : f32
      %187 = vector.broadcast %cst_114 : f32 to vector<8x1xf32>
      %188 = arith.divf %186, %187 : vector<8x1xf32>
      %189 = vector.broadcast %188 : vector<8x1xf32> to vector<8x32xf32>
      %190 = arith.subf %182, %189 : vector<8x32xf32>
      %191 = arith.mulf %190, %190 : vector<8x32xf32>
      %cst_115 = arith.constant dense<0.000000e+00> : vector<8xf32>
      %192 = vector.multi_reduction <add>, %191, %cst_115 [1] : vector<8x32xf32> to vector<8xf32>
      %193 = vector.shape_cast %192 : vector<8xf32> to vector<8x1xf32>
      %cst_116 = arith.constant 3.200000e+01 : f32
      %194 = vector.broadcast %cst_116 : f32 to vector<8x1xf32>
      %195 = arith.divf %193, %194 : vector<8x1xf32>
      %196 = vector.broadcast %188 : vector<8x1xf32> to vector<8x32xf32>
      %197 = arith.subf %182, %196 : vector<8x32xf32>
      %cst_117 = arith.constant 9.99999974E-6 : f32
      %198 = vector.broadcast %cst_117 : f32 to vector<8x1xf32>
      %199 = arith.addf %195, %198 : vector<8x1xf32>
      %200 = math.rsqrt %199 : vector<8x1xf32>
      %201 = vector.broadcast %200 : vector<8x1xf32> to vector<8x32xf32>
      %202 = arith.mulf %197, %201 : vector<8x32xf32>
      %203 = vector.broadcast %183 : vector<1x32xf32> to vector<8x32xf32>
      %204 = arith.mulf %202, %203 : vector<8x32xf32>
      %205 = vector.broadcast %184 : vector<1x32xf32> to vector<8x32xf32>
      %206 = arith.addf %204, %205 : vector<8x32xf32>
      %207 = arith.truncf %206 : vector<8x32xf32> to vector<8x32xbf16>
      %c0_118 = arith.constant 0 : index
      %c0_119 = arith.constant 0 : index
      %208 = vector.load %arg20[%c0_118, %c0_119] : memref<8x32xbf16, #tpu.memory_space<vmem>>, vector<8x32xbf16>
      tpu.vector_store %arg20[%c0_118, %c0_119], %207 {strides = array<i32>} : memref<8x32xbf16, #tpu.memory_space<vmem>>, vector<8x32xbf16>,
      %c0_120 = arith.constant 0 : index
      %c0_121 = arith.constant 0 : index
      %209 = vector.load %arg7[%c0_120, %c0_121] : memref<32x32xbf16, #tpu.memory_space<vmem>>, vector<32x32xbf16>
      %cst_122 = arith.constant dense<0.000000e+00> : vector<8x32xf32>
      %210 = tpu.matmul %207, %209, %cst_122 {dimension_numbers = #tpu.dot_dimension_numbers<[1], [0], [0], [1], [0, 0, 1, 1], [], []>} : vector<8x32xbf16>, vector<32x32xbf16>, vector<8x32xf32> -> vector<8x32xf32>
      %c0_123 = arith.constant 0 : index
      %c0_124 = arith.constant 0 : index
      %211 = vector.load %arg8[%c0_123, %c0_124] : memref<1x32xf32, #tpu.memory_space<vmem>>, vector<1x32xf32>
      %212 = vector.broadcast %211 : vector<1x32xf32> to vector<8x32xf32>
      %213 = arith.addf %210, %212 : vector<8x32xf32>
      %214 = arith.truncf %213 : vector<8x32xf32> to vector<8x32xbf16>
      %c0_125 = arith.constant 0 : index
      %c0_126 = arith.constant 0 : index
      %215 = vector.load %arg9[%c0_125, %c0_126] : memref<32x32xbf16, #tpu.memory_space<vmem>>, vector<32x32xbf16>
      %cst_127 = arith.constant dense<0.000000e+00> : vector<8x32xf32>
      %216 = tpu.matmul %207, %215, %cst_127 {dimension_numbers = #tpu.dot_dimension_numbers<[1], [0], [0], [1], [0, 0, 1, 1], [], []>} : vector<8x32xbf16>, vector<32x32xbf16>, vector<8x32xf32> -> vector<8x32xf32>
      %c0_128 = arith.constant 0 : index
      %c0_129 = arith.constant 0 : index
      %217 = vector.load %arg10[%c0_128, %c0_129] : memref<1x32xf32, #tpu.memory_space<vmem>>, vector<1x32xf32>
      %218 = vector.broadcast %217 : vector<1x32xf32> to vector<8x32xf32>
      %219 = arith.addf %216, %218 : vector<8x32xf32>
      %220 = arith.truncf %219 : vector<8x32xf32> to vector<8x32xbf16>
      %221 = vector.extract_strided_slice %214 {offsets = [0, 0], sizes = [8, 8], strides = [1, 1]} : vector<8x32xbf16> to vector<8x8xbf16>
      %c0_130 = arith.constant 0 : index
      %c0_131 = arith.constant 0 : index
      %c0_132 = arith.constant 0 : index
      %222 = vector.load %arg21[%c0_130, %c0_131, %c0_132] : memref<4x8x8xbf16, #tpu.memory_space<vmem>>, vector<1x8x8xbf16>
      %223 = vector.shape_cast %222 : vector<1x8x8xbf16> to vector<8x8xbf16>
      %224 = vector.shape_cast %221 : vector<8x8xbf16> to vector<1x8x8xbf16>
      tpu.vector_store %arg21[%c0_130, %c0_131, %c0_132], %224 {strides = array<i32>} : memref<4x8x8xbf16, #tpu.memory_space<vmem>>, vector<1x8x8xbf16>,
      %225 = vector.extract_strided_slice %220 {offsets = [0, 0], sizes = [8, 8], strides = [1, 1]} : vector<8x32xbf16> to vector<8x8xbf16>
      %c0_133 = arith.constant 0 : index
      %c0_134 = arith.constant 0 : index
      %c0_135 = arith.constant 0 : index
      %226 = vector.load %arg22[%c0_133, %c0_134, %c0_135] : memref<4x8x8xbf16, #tpu.memory_space<vmem>>, vector<1x8x8xbf16>
      %227 = vector.shape_cast %226 : vector<1x8x8xbf16> to vector<8x8xbf16>
      %228 = vector.shape_cast %225 : vector<8x8xbf16> to vector<1x8x8xbf16>
      tpu.vector_store %arg22[%c0_133, %c0_134, %c0_135], %228 {strides = array<i32>} : memref<4x8x8xbf16, #tpu.memory_space<vmem>>, vector<1x8x8xbf16>,
      %229 = vector.extract_strided_slice %214 {offsets = [0, 8], sizes = [8, 8], strides = [1, 1]} : vector<8x32xbf16> to vector<8x8xbf16>
      %c1_136 = arith.constant 1 : index
      %c0_137 = arith.constant 0 : index
      %c0_138 = arith.constant 0 : index
      %230 = vector.load %arg21[%c1_136, %c0_137, %c0_138] : memref<4x8x8xbf16, #tpu.memory_space<vmem>>, vector<1x8x8xbf16>
      %231 = vector.shape_cast %230 : vector<1x8x8xbf16> to vector<8x8xbf16>
      %232 = vector.shape_cast %229 : vector<8x8xbf16> to vector<1x8x8xbf16>
      tpu.vector_store %arg21[%c1_136, %c0_137, %c0_138], %232 {strides = array<i32>} : memref<4x8x8xbf16, #tpu.memory_space<vmem>>, vector<1x8x8xbf16>,
      %233 = vector.extract_strided_slice %220 {offsets = [0, 8], sizes = [8, 8], strides = [1, 1]} : vector<8x32xbf16> to vector<8x8xbf16>
      %c1_139 = arith.constant 1 : index
      %c0_140 = arith.constant 0 : index
      %c0_141 = arith.constant 0 : index
      %234 = vector.load %arg22[%c1_139, %c0_140, %c0_141] : memref<4x8x8xbf16, #tpu.memory_space<vmem>>, vector<1x8x8xbf16>
      %235 = vector.shape_cast %234 : vector<1x8x8xbf16> to vector<8x8xbf16>
      %236 = vector.shape_cast %233 : vector<8x8xbf16> to vector<1x8x8xbf16>
      tpu.vector_store %arg22[%c1_139, %c0_140, %c0_141], %236 {strides = array<i32>} : memref<4x8x8xbf16, #tpu.memory_space<vmem>>, vector<1x8x8xbf16>,
      %237 = vector.extract_strided_slice %214 {offsets = [0, 16], sizes = [8, 8], strides = [1, 1]} : vector<8x32xbf16> to vector<8x8xbf16>
      %c2_142 = arith.constant 2 : index
      %c0_143 = arith.constant 0 : index
      %c0_144 = arith.constant 0 : index
      %238 = vector.load %arg21[%c2_142, %c0_143, %c0_144] : memref<4x8x8xbf16, #tpu.memory_space<vmem>>, vector<1x8x8xbf16>
      %239 = vector.shape_cast %238 : vector<1x8x8xbf16> to vector<8x8xbf16>
      %240 = vector.shape_cast %237 : vector<8x8xbf16> to vector<1x8x8xbf16>
      tpu.vector_store %arg21[%c2_142, %c0_143, %c0_144], %240 {strides = array<i32>} : memref<4x8x8xbf16, #tpu.memory_space<vmem>>, vector<1x8x8xbf16>,
      %241 = vector.extract_strided_slice %220 {offsets = [0, 16], sizes = [8, 8], strides = [1, 1]} : vector<8x32xbf16> to vector<8x8xbf16>
      %c2_145 = arith.constant 2 : index
      %c0_146 = arith.constant 0 : index
      %c0_147 = arith.constant 0 : index
      %242 = vector.load %arg22[%c2_145, %c0_146, %c0_147] : memref<4x8x8xbf16, #tpu.memory_space<vmem>>, vector<1x8x8xbf16>
      %243 = vector.shape_cast %242 : vector<1x8x8xbf16> to vector<8x8xbf16>
      %244 = vector.shape_cast %241 : vector<8x8xbf16> to vector<1x8x8xbf16>
      tpu.vector_store %arg22[%c2_145, %c0_146, %c0_147], %244 {strides = array<i32>} : memref<4x8x8xbf16, #tpu.memory_space<vmem>>, vector<1x8x8xbf16>,
      %245 = vector.extract_strided_slice %214 {offsets = [0, 24], sizes = [8, 8], strides = [1, 1]} : vector<8x32xbf16> to vector<8x8xbf16>
      %c3_148 = arith.constant 3 : index
      %c0_149 = arith.constant 0 : index
      %c0_150 = arith.constant 0 : index
      %246 = vector.load %arg21[%c3_148, %c0_149, %c0_150] : memref<4x8x8xbf16, #tpu.memory_space<vmem>>, vector<1x8x8xbf16>
      %247 = vector.shape_cast %246 : vector<1x8x8xbf16> to vector<8x8xbf16>
      %248 = vector.shape_cast %245 : vector<8x8xbf16> to vector<1x8x8xbf16>
      tpu.vector_store %arg21[%c3_148, %c0_149, %c0_150], %248 {strides = array<i32>} : memref<4x8x8xbf16, #tpu.memory_space<vmem>>, vector<1x8x8xbf16>,
      %249 = vector.extract_strided_slice %220 {offsets = [0, 24], sizes = [8, 8], strides = [1, 1]} : vector<8x32xbf16> to vector<8x8xbf16>
      %c3_151 = arith.constant 3 : index
      %c0_152 = arith.constant 0 : index
      %c0_153 = arith.constant 0 : index
      %250 = vector.load %arg22[%c3_151, %c0_152, %c0_153] : memref<4x8x8xbf16, #tpu.memory_space<vmem>>, vector<1x8x8xbf16>
      %251 = vector.shape_cast %250 : vector<1x8x8xbf16> to vector<8x8xbf16>
      %252 = vector.shape_cast %249 : vector<8x8xbf16> to vector<1x8x8xbf16>
      tpu.vector_store %arg22[%c3_151, %c0_152, %c0_153], %252 {strides = array<i32>} : memref<4x8x8xbf16, #tpu.memory_space<vmem>>, vector<1x8x8xbf16>,
    } else {
    }
    %c8_i32 = arith.constant 8 : i32
    %3 = arith.muli %arg1, %c8_i32 : i32
    %4 = tpu.assume_multiple %3, 8 : i32
    %c0 = arith.constant 0 : index
    %5 = arith.index_cast %4 : i32 to index
    %c0_1 = arith.constant 0 : index
    %6 = vector.load %arg2[%c0, %5, %c0_1] : memref<1x8x32xf32, #tpu.memory_space<vmem>>, vector<1x8x32xf32>
    %7 = vector.shape_cast %6 : vector<1x8x32xf32> to vector<8x32xf32>
    %8 = arith.index_cast %4 : i32 to index
    %c0_2 = arith.constant 0 : index
    %9 = vector.load %arg20[%8, %c0_2] : memref<8x32xbf16, #tpu.memory_space<vmem>>, vector<8x32xbf16>
    %c0_3 = arith.constant 0 : index
    %c0_4 = arith.constant 0 : index
    %c0_5 = arith.constant 0 : index
    %10 = vector.load %arg5[%c0_3, %c0_4, %c0_5] : memref<4x32x8xbf16, #tpu.memory_space<vmem>>, vector<1x32x8xbf16>
    %11 = vector.shape_cast %10 : vector<1x32x8xbf16> to vector<32x8xbf16>
    %cst = arith.constant dense<0.000000e+00> : vector<8x8xf32>
    %12 = tpu.matmul %9, %11, %cst {dimension_numbers = #tpu.dot_dimension_numbers<[1], [0], [0], [1], [0, 0, 1, 1], [], []>} : vector<8x32xbf16>, vector<32x8xbf16>, vector<8x8xf32> -> vector<8x8xf32>
    %c0_6 = arith.constant 0 : index
    %c0_7 = arith.constant 0 : index
    %c0_8 = arith.constant 0 : index
    %13 = vector.load %arg6[%c0_6, %c0_7, %c0_8] : memref<4x1x8xf32, #tpu.memory_space<vmem>>, vector<1x1x8xf32>
    %14 = vector.shape_cast %13 : vector<1x1x8xf32> to vector<1x8xf32>
    %15 = vector.broadcast %14 : vector<1x8xf32> to vector<8x8xf32>
    %16 = arith.addf %12, %15 : vector<8x8xf32>
    %17 = arith.truncf %16 : vector<8x8xf32> to vector<8x8xbf16>
    %c0_9 = arith.constant 0 : index
    %c0_10 = arith.constant 0 : index
    %c0_11 = arith.constant 0 : index
    %18 = vector.load %arg21[%c0_9, %c0_10, %c0_11] : memref<4x8x8xbf16, #tpu.memory_space<vmem>>, vector<1x8x8xbf16>
    %19 = vector.shape_cast %18 : vector<1x8x8xbf16> to vector<8x8xbf16>
    %cst_12 = arith.constant dense<0.000000e+00> : vector<8x8xf32>
    %20 = tpu.matmul %17, %19, %cst_12 {dimension_numbers = #tpu.dot_dimension_numbers<[1], [1], [0], [0], [0, 0, 1, 0], [], []>} : vector<8x8xbf16>, vector<8x8xbf16>, vector<8x8xf32> -> vector<8x8xf32>
    %cst_13 = arith.constant dense<0xFF800000> : vector<8xf32>
    %21 = vector.multi_reduction <maximumf>, %20, %cst_13 [1] : vector<8x8xf32> to vector<8xf32>
    %22 = vector.shape_cast %21 : vector<8xf32> to vector<8x1xf32>
    %23 = vector.broadcast %22 : vector<8x1xf32> to vector<8x8xf32>
    %24 = arith.subf %20, %23 : vector<8x8xf32>
    %25 = math.exp %24 : vector<8x8xf32>
    %cst_14 = arith.constant dense<0.000000e+00> : vector<8xf32>
    %26 = vector.multi_reduction <add>, %25, %cst_14 [1] : vector<8x8xf32> to vector<8xf32>
    %27 = vector.shape_cast %26 : vector<8xf32> to vector<8x1xf32>
    %28 = tpu.reciprocal %27 {approx = true} : vector<8x1xf32> -> vector<8x1xf32>
    %29 = vector.broadcast %28 : vector<8x1xf32> to vector<8x8xf32>
    %30 = arith.mulf %25, %29 : vector<8x8xf32>
    %31 = arith.truncf %30 : vector<8x8xf32> to vector<8x8xbf16>
    %c0_15 = arith.constant 0 : index
    %c0_16 = arith.constant 0 : index
    %c0_17 = arith.constant 0 : index
    %32 = vector.load %arg22[%c0_15, %c0_16, %c0_17] : memref<4x8x8xbf16, #tpu.memory_space<vmem>>, vector<1x8x8xbf16>
    %33 = vector.shape_cast %32 : vector<1x8x8xbf16> to vector<8x8xbf16>
    %cst_18 = arith.constant dense<0.000000e+00> : vector<8x8xf32>
    %34 = tpu.matmul %31, %33, %cst_18 {dimension_numbers = #tpu.dot_dimension_numbers<[1], [0], [0], [1], [0, 0, 1, 1], [], []>} : vector<8x8xbf16>, vector<8x8xbf16>, vector<8x8xf32> -> vector<8x8xf32>
    %c0_19 = arith.constant 0 : index
    %c0_20 = arith.constant 0 : index
    %35 = vector.load %arg23[%c0_19, %c0_20] : memref<8x32xf32, #tpu.memory_space<vmem>>, vector<8x8xf32>
    tpu.vector_store %arg23[%c0_19, %c0_20], %34 {strides = array<i32>} : memref<8x32xf32, #tpu.memory_space<vmem>>, vector<8x8xf32>,
    %c1 = arith.constant 1 : index
    %c0_21 = arith.constant 0 : index
    %c0_22 = arith.constant 0 : index
    %36 = vector.load %arg5[%c1, %c0_21, %c0_22] : memref<4x32x8xbf16, #tpu.memory_space<vmem>>, vector<1x32x8xbf16>
    %37 = vector.shape_cast %36 : vector<1x32x8xbf16> to vector<32x8xbf16>
    %cst_23 = arith.constant dense<0.000000e+00> : vector<8x8xf32>
    %38 = tpu.matmul %9, %37, %cst_23 {dimension_numbers = #tpu.dot_dimension_numbers<[1], [0], [0], [1], [0, 0, 1, 1], [], []>} : vector<8x32xbf16>, vector<32x8xbf16>, vector<8x8xf32> -> vector<8x8xf32>
    %c1_24 = arith.constant 1 : index
    %c0_25 = arith.constant 0 : index
    %c0_26 = arith.constant 0 : index
    %39 = vector.load %arg6[%c1_24, %c0_25, %c0_26] : memref<4x1x8xf32, #tpu.memory_space<vmem>>, vector<1x1x8xf32>
    %40 = vector.shape_cast %39 : vector<1x1x8xf32> to vector<1x8xf32>
    %41 = vector.broadcast %40 : vector<1x8xf32> to vector<8x8xf32>
    %42 = arith.addf %38, %41 : vector<8x8xf32>
    %43 = arith.truncf %42 : vector<8x8xf32> to vector<8x8xbf16>
    %c1_27 = arith.constant 1 : index
    %c0_28 = arith.constant 0 : index
    %c0_29 = arith.constant 0 : index
    %44 = vector.load %arg21[%c1_27, %c0_28, %c0_29] : memref<4x8x8xbf16, #tpu.memory_space<vmem>>, vector<1x8x8xbf16>
    %45 = vector.shape_cast %44 : vector<1x8x8xbf16> to vector<8x8xbf16>
    %cst_30 = arith.constant dense<0.000000e+00> : vector<8x8xf32>
    %46 = tpu.matmul %43, %45, %cst_30 {dimension_numbers = #tpu.dot_dimension_numbers<[1], [1], [0], [0], [0, 0, 1, 0], [], []>} : vector<8x8xbf16>, vector<8x8xbf16>, vector<8x8xf32> -> vector<8x8xf32>
    %cst_31 = arith.constant dense<0xFF800000> : vector<8xf32>
    %47 = vector.multi_reduction <maximumf>, %46, %cst_31 [1] : vector<8x8xf32> to vector<8xf32>
    %48 = vector.shape_cast %47 : vector<8xf32> to vector<8x1xf32>
    %49 = vector.broadcast %48 : vector<8x1xf32> to vector<8x8xf32>
    %50 = arith.subf %46, %49 : vector<8x8xf32>
    %51 = math.exp %50 : vector<8x8xf32>
    %cst_32 = arith.constant dense<0.000000e+00> : vector<8xf32>
    %52 = vector.multi_reduction <add>, %51, %cst_32 [1] : vector<8x8xf32> to vector<8xf32>
    %53 = vector.shape_cast %52 : vector<8xf32> to vector<8x1xf32>
    %54 = tpu.reciprocal %53 {approx = true} : vector<8x1xf32> -> vector<8x1xf32>
    %55 = vector.broadcast %54 : vector<8x1xf32> to vector<8x8xf32>
    %56 = arith.mulf %51, %55 : vector<8x8xf32>
    %57 = arith.truncf %56 : vector<8x8xf32> to vector<8x8xbf16>
    %c1_33 = arith.constant 1 : index
    %c0_34 = arith.constant 0 : index
    %c0_35 = arith.constant 0 : index
    %58 = vector.load %arg22[%c1_33, %c0_34, %c0_35] : memref<4x8x8xbf16, #tpu.memory_space<vmem>>, vector<1x8x8xbf16>
    %59 = vector.shape_cast %58 : vector<1x8x8xbf16> to vector<8x8xbf16>
    %cst_36 = arith.constant dense<0.000000e+00> : vector<8x8xf32>
    %60 = tpu.matmul %57, %59, %cst_36 {dimension_numbers = #tpu.dot_dimension_numbers<[1], [0], [0], [1], [0, 0, 1, 1], [], []>} : vector<8x8xbf16>, vector<8x8xbf16>, vector<8x8xf32> -> vector<8x8xf32>
    %c0_37 = arith.constant 0 : index
    %c8 = arith.constant 8 : index
    %61 = vector.load %arg23[%c0_37, %c8] : memref<8x32xf32, #tpu.memory_space<vmem>>, vector<8x8xf32>
    tpu.vector_store %arg23[%c0_37, %c8], %60 {strides = array<i32>} : memref<8x32xf32, #tpu.memory_space<vmem>>, vector<8x8xf32>,
    %c2 = arith.constant 2 : index
    %c0_38 = arith.constant 0 : index
    %c0_39 = arith.constant 0 : index
    %62 = vector.load %arg5[%c2, %c0_38, %c0_39] : memref<4x32x8xbf16, #tpu.memory_space<vmem>>, vector<1x32x8xbf16>
    %63 = vector.shape_cast %62 : vector<1x32x8xbf16> to vector<32x8xbf16>
    %cst_40 = arith.constant dense<0.000000e+00> : vector<8x8xf32>
    %64 = tpu.matmul %9, %63, %cst_40 {dimension_numbers = #tpu.dot_dimension_numbers<[1], [0], [0], [1], [0, 0, 1, 1], [], []>} : vector<8x32xbf16>, vector<32x8xbf16>, vector<8x8xf32> -> vector<8x8xf32>
    %c2_41 = arith.constant 2 : index
    %c0_42 = arith.constant 0 : index
    %c0_43 = arith.constant 0 : index
    %65 = vector.load %arg6[%c2_41, %c0_42, %c0_43] : memref<4x1x8xf32, #tpu.memory_space<vmem>>, vector<1x1x8xf32>
    %66 = vector.shape_cast %65 : vector<1x1x8xf32> to vector<1x8xf32>
    %67 = vector.broadcast %66 : vector<1x8xf32> to vector<8x8xf32>
    %68 = arith.addf %64, %67 : vector<8x8xf32>
    %69 = arith.truncf %68 : vector<8x8xf32> to vector<8x8xbf16>
    %c2_44 = arith.constant 2 : index
    %c0_45 = arith.constant 0 : index
    %c0_46 = arith.constant 0 : index
    %70 = vector.load %arg21[%c2_44, %c0_45, %c0_46] : memref<4x8x8xbf16, #tpu.memory_space<vmem>>, vector<1x8x8xbf16>
    %71 = vector.shape_cast %70 : vector<1x8x8xbf16> to vector<8x8xbf16>
    %cst_47 = arith.constant dense<0.000000e+00> : vector<8x8xf32>
    %72 = tpu.matmul %69, %71, %cst_47 {dimension_numbers = #tpu.dot_dimension_numbers<[1], [1], [0], [0], [0, 0, 1, 0], [], []>} : vector<8x8xbf16>, vector<8x8xbf16>, vector<8x8xf32> -> vector<8x8xf32>
    %cst_48 = arith.constant dense<0xFF800000> : vector<8xf32>
    %73 = vector.multi_reduction <maximumf>, %72, %cst_48 [1] : vector<8x8xf32> to vector<8xf32>
    %74 = vector.shape_cast %73 : vector<8xf32> to vector<8x1xf32>
    %75 = vector.broadcast %74 : vector<8x1xf32> to vector<8x8xf32>
    %76 = arith.subf %72, %75 : vector<8x8xf32>
    %77 = math.exp %76 : vector<8x8xf32>
    %cst_49 = arith.constant dense<0.000000e+00> : vector<8xf32>
    %78 = vector.multi_reduction <add>, %77, %cst_49 [1] : vector<8x8xf32> to vector<8xf32>
    %79 = vector.shape_cast %78 : vector<8xf32> to vector<8x1xf32>
    %80 = tpu.reciprocal %79 {approx = true} : vector<8x1xf32> -> vector<8x1xf32>
    %81 = vector.broadcast %80 : vector<8x1xf32> to vector<8x8xf32>
    %82 = arith.mulf %77, %81 : vector<8x8xf32>
    %83 = arith.truncf %82 : vector<8x8xf32> to vector<8x8xbf16>
    %c2_50 = arith.constant 2 : index
    %c0_51 = arith.constant 0 : index
    %c0_52 = arith.constant 0 : index
    %84 = vector.load %arg22[%c2_50, %c0_51, %c0_52] : memref<4x8x8xbf16, #tpu.memory_space<vmem>>, vector<1x8x8xbf16>
    %85 = vector.shape_cast %84 : vector<1x8x8xbf16> to vector<8x8xbf16>
    %cst_53 = arith.constant dense<0.000000e+00> : vector<8x8xf32>
    %86 = tpu.matmul %83, %85, %cst_53 {dimension_numbers = #tpu.dot_dimension_numbers<[1], [0], [0], [1], [0, 0, 1, 1], [], []>} : vector<8x8xbf16>, vector<8x8xbf16>, vector<8x8xf32> -> vector<8x8xf32>
    %c0_54 = arith.constant 0 : index
    %c16 = arith.constant 16 : index
    %87 = vector.load %arg23[%c0_54, %c16] : memref<8x32xf32, #tpu.memory_space<vmem>>, vector<8x8xf32>
    tpu.vector_store %arg23[%c0_54, %c16], %86 {strides = array<i32>} : memref<8x32xf32, #tpu.memory_space<vmem>>, vector<8x8xf32>,
    %c3 = arith.constant 3 : index
    %c0_55 = arith.constant 0 : index
    %c0_56 = arith.constant 0 : index
    %88 = vector.load %arg5[%c3, %c0_55, %c0_56] : memref<4x32x8xbf16, #tpu.memory_space<vmem>>, vector<1x32x8xbf16>
    %89 = vector.shape_cast %88 : vector<1x32x8xbf16> to vector<32x8xbf16>
    %cst_57 = arith.constant dense<0.000000e+00> : vector<8x8xf32>
    %90 = tpu.matmul %9, %89, %cst_57 {dimension_numbers = #tpu.dot_dimension_numbers<[1], [0], [0], [1], [0, 0, 1, 1], [], []>} : vector<8x32xbf16>, vector<32x8xbf16>, vector<8x8xf32> -> vector<8x8xf32>
    %c3_58 = arith.constant 3 : index
    %c0_59 = arith.constant 0 : index
    %c0_60 = arith.constant 0 : index
    %91 = vector.load %arg6[%c3_58, %c0_59, %c0_60] : memref<4x1x8xf32, #tpu.memory_space<vmem>>, vector<1x1x8xf32>
    %92 = vector.shape_cast %91 : vector<1x1x8xf32> to vector<1x8xf32>
    %93 = vector.broadcast %92 : vector<1x8xf32> to vector<8x8xf32>
    %94 = arith.addf %90, %93 : vector<8x8xf32>
    %95 = arith.truncf %94 : vector<8x8xf32> to vector<8x8xbf16>
    %c3_61 = arith.constant 3 : index
    %c0_62 = arith.constant 0 : index
    %c0_63 = arith.constant 0 : index
    %96 = vector.load %arg21[%c3_61, %c0_62, %c0_63] : memref<4x8x8xbf16, #tpu.memory_space<vmem>>, vector<1x8x8xbf16>
    %97 = vector.shape_cast %96 : vector<1x8x8xbf16> to vector<8x8xbf16>
    %cst_64 = arith.constant dense<0.000000e+00> : vector<8x8xf32>
    %98 = tpu.matmul %95, %97, %cst_64 {dimension_numbers = #tpu.dot_dimension_numbers<[1], [1], [0], [0], [0, 0, 1, 0], [], []>} : vector<8x8xbf16>, vector<8x8xbf16>, vector<8x8xf32> -> vector<8x8xf32>
    %cst_65 = arith.constant dense<0xFF800000> : vector<8xf32>
    %99 = vector.multi_reduction <maximumf>, %98, %cst_65 [1] : vector<8x8xf32> to vector<8xf32>
    %100 = vector.shape_cast %99 : vector<8xf32> to vector<8x1xf32>
    %101 = vector.broadcast %100 : vector<8x1xf32> to vector<8x8xf32>
    %102 = arith.subf %98, %101 : vector<8x8xf32>
    %103 = math.exp %102 : vector<8x8xf32>
    %cst_66 = arith.constant dense<0.000000e+00> : vector<8xf32>
    %104 = vector.multi_reduction <add>, %103, %cst_66 [1] : vector<8x8xf32> to vector<8xf32>
    %105 = vector.shape_cast %104 : vector<8xf32> to vector<8x1xf32>
    %106 = tpu.reciprocal %105 {approx = true} : vector<8x1xf32> -> vector<8x1xf32>
    %107 = vector.broadcast %106 : vector<8x1xf32> to vector<8x8xf32>
    %108 = arith.mulf %103, %107 : vector<8x8xf32>
    %109 = arith.truncf %108 : vector<8x8xf32> to vector<8x8xbf16>
    %c3_67 = arith.constant 3 : index
    %c0_68 = arith.constant 0 : index
    %c0_69 = arith.constant 0 : index
    %110 = vector.load %arg22[%c3_67, %c0_68, %c0_69] : memref<4x8x8xbf16, #tpu.memory_space<vmem>>, vector<1x8x8xbf16>
    %111 = vector.shape_cast %110 : vector<1x8x8xbf16> to vector<8x8xbf16>
    %cst_70 = arith.constant dense<0.000000e+00> : vector<8x8xf32>
    %112 = tpu.matmul %109, %111, %cst_70 {dimension_numbers = #tpu.dot_dimension_numbers<[1], [0], [0], [1], [0, 0, 1, 1], [], []>} : vector<8x8xbf16>, vector<8x8xbf16>, vector<8x8xf32> -> vector<8x8xf32>
    %c0_71 = arith.constant 0 : index
    %c24 = arith.constant 24 : index
    %113 = vector.load %arg23[%c0_71, %c24] : memref<8x32xf32, #tpu.memory_space<vmem>>, vector<8x8xf32>
    tpu.vector_store %arg23[%c0_71, %c24], %112 {strides = array<i32>} : memref<8x32xf32, #tpu.memory_space<vmem>>, vector<8x8xf32>,
    %c0_72 = arith.constant 0 : index
    %c0_73 = arith.constant 0 : index
    %114 = vector.load %arg23[%c0_72, %c0_73] : memref<8x32xf32, #tpu.memory_space<vmem>>, vector<8x32xf32>
    %115 = arith.addf %7, %114 : vector<8x32xf32>
    %c0_74 = arith.constant 0 : index
    %c0_75 = arith.constant 0 : index
    %116 = vector.load %arg11[%c0_74, %c0_75] : memref<1x32xf32, #tpu.memory_space<vmem>>, vector<1x32xf32>
    %c0_76 = arith.constant 0 : index
    %c0_77 = arith.constant 0 : index
    %117 = vector.load %arg12[%c0_76, %c0_77] : memref<1x32xf32, #tpu.memory_space<vmem>>, vector<1x32xf32>
    %cst_78 = arith.constant dense<0.000000e+00> : vector<8xf32>
    %118 = vector.multi_reduction <add>, %115, %cst_78 [1] : vector<8x32xf32> to vector<8xf32>
    %119 = vector.shape_cast %118 : vector<8xf32> to vector<8x1xf32>
    %cst_79 = arith.constant 3.200000e+01 : f32
    %120 = vector.broadcast %cst_79 : f32 to vector<8x1xf32>
    %121 = arith.divf %119, %120 : vector<8x1xf32>
    %122 = vector.broadcast %121 : vector<8x1xf32> to vector<8x32xf32>
    %123 = arith.subf %115, %122 : vector<8x32xf32>
    %124 = arith.mulf %123, %123 : vector<8x32xf32>
    %cst_80 = arith.constant dense<0.000000e+00> : vector<8xf32>
    %125 = vector.multi_reduction <add>, %124, %cst_80 [1] : vector<8x32xf32> to vector<8xf32>
    %126 = vector.shape_cast %125 : vector<8xf32> to vector<8x1xf32>
    %cst_81 = arith.constant 3.200000e+01 : f32
    %127 = vector.broadcast %cst_81 : f32 to vector<8x1xf32>
    %128 = arith.divf %126, %127 : vector<8x1xf32>
    %129 = vector.broadcast %121 : vector<8x1xf32> to vector<8x32xf32>
    %130 = arith.subf %115, %129 : vector<8x32xf32>
    %cst_82 = arith.constant 9.99999974E-6 : f32
    %131 = vector.broadcast %cst_82 : f32 to vector<8x1xf32>
    %132 = arith.addf %128, %131 : vector<8x1xf32>
    %133 = math.rsqrt %132 : vector<8x1xf32>
    %134 = vector.broadcast %133 : vector<8x1xf32> to vector<8x32xf32>
    %135 = arith.mulf %130, %134 : vector<8x32xf32>
    %136 = vector.broadcast %116 : vector<1x32xf32> to vector<8x32xf32>
    %137 = arith.mulf %135, %136 : vector<8x32xf32>
    %138 = vector.broadcast %117 : vector<1x32xf32> to vector<8x32xf32>
    %139 = arith.addf %137, %138 : vector<8x32xf32>
    %140 = arith.truncf %139 : vector<8x32xf32> to vector<8x32xbf16>
    %c0_83 = arith.constant 0 : index
    %c0_84 = arith.constant 0 : index
    %141 = vector.load %arg13[%c0_83, %c0_84] : memref<32x64xbf16, #tpu.memory_space<vmem>>, vector<32x64xbf16>
    %cst_85 = arith.constant dense<0.000000e+00> : vector<8x64xf32>
    %142 = tpu.matmul %140, %141, %cst_85 {dimension_numbers = #tpu.dot_dimension_numbers<[1], [0], [0], [1], [0, 0, 1, 1], [], []>} : vector<8x32xbf16>, vector<32x64xbf16>, vector<8x64xf32> -> vector<8x64xf32>
    %c0_86 = arith.constant 0 : index
    %c0_87 = arith.constant 0 : index
    %143 = vector.load %arg14[%c0_86, %c0_87] : memref<1x64xf32, #tpu.memory_space<vmem>>, vector<1x64xf32>
    %144 = vector.broadcast %143 : vector<1x64xf32> to vector<8x64xf32>
    %145 = arith.addf %142, %144 : vector<8x64xf32>
    %c0_88 = arith.constant 0 : index
    %c0_89 = arith.constant 0 : index
    %146 = vector.load %arg15[%c0_88, %c0_89] : memref<1x64xf32, #tpu.memory_space<vmem>>, vector<1x64xf32>
    %c0_90 = arith.constant 0 : index
    %c0_91 = arith.constant 0 : index
    %147 = vector.load %arg16[%c0_90, %c0_91] : memref<1x64xf32, #tpu.memory_space<vmem>>, vector<1x64xf32>
    %cst_92 = arith.constant dense<0.000000e+00> : vector<8xf32>
    %148 = vector.multi_reduction <add>, %145, %cst_92 [1] : vector<8x64xf32> to vector<8xf32>
    %149 = vector.shape_cast %148 : vector<8xf32> to vector<8x1xf32>
    %cst_93 = arith.constant 6.400000e+01 : f32
    %150 = vector.broadcast %cst_93 : f32 to vector<8x1xf32>
    %151 = arith.divf %149, %150 : vector<8x1xf32>
    %152 = vector.broadcast %151 : vector<8x1xf32> to vector<8x64xf32>
    %153 = arith.subf %145, %152 : vector<8x64xf32>
    %154 = arith.mulf %153, %153 : vector<8x64xf32>
    %cst_94 = arith.constant dense<0.000000e+00> : vector<8xf32>
    %155 = vector.multi_reduction <add>, %154, %cst_94 [1] : vector<8x64xf32> to vector<8xf32>
    %156 = vector.shape_cast %155 : vector<8xf32> to vector<8x1xf32>
    %cst_95 = arith.constant 6.400000e+01 : f32
    %157 = vector.broadcast %cst_95 : f32 to vector<8x1xf32>
    %158 = arith.divf %156, %157 : vector<8x1xf32>
    %159 = vector.broadcast %151 : vector<8x1xf32> to vector<8x64xf32>
    %160 = arith.subf %145, %159 : vector<8x64xf32>
    %cst_96 = arith.constant 9.99999974E-6 : f32
    %161 = vector.broadcast %cst_96 : f32 to vector<8x1xf32>
    %162 = arith.addf %158, %161 : vector<8x1xf32>
    %163 = math.rsqrt %162 : vector<8x1xf32>
    %164 = vector.broadcast %163 : vector<8x1xf32> to vector<8x64xf32>
    %165 = arith.mulf %160, %164 : vector<8x64xf32>
    %166 = vector.broadcast %146 : vector<1x64xf32> to vector<8x64xf32>
    %167 = arith.mulf %165, %166 : vector<8x64xf32>
    %168 = vector.broadcast %147 : vector<1x64xf32> to vector<8x64xf32>
    %169 = arith.addf %167, %168 : vector<8x64xf32>
    %cst_97 = arith.constant 0.000000e+00 : f32
    %170 = vector.broadcast %cst_97 : f32 to vector<8x64xf32>
    %171 = arith.maximumf %169, %170 : vector<8x64xf32>
    %172 = arith.truncf %171 : vector<8x64xf32> to vector<8x64xbf16>
    %c0_98 = arith.constant 0 : index
    %c0_99 = arith.constant 0 : index
    %173 = vector.load %arg17[%c0_98, %c0_99] : memref<64x32xbf16, #tpu.memory_space<vmem>>, vector<64x32xbf16>
    %cst_100 = arith.constant dense<0.000000e+00> : vector<8x32xf32>
    %174 = tpu.matmul %172, %173, %cst_100 {dimension_numbers = #tpu.dot_dimension_numbers<[1], [0], [0], [1], [0, 0, 1, 1], [], []>} : vector<8x64xbf16>, vector<64x32xbf16>, vector<8x32xf32> -> vector<8x32xf32>
    %c0_101 = arith.constant 0 : index
    %c0_102 = arith.constant 0 : index
    %175 = vector.load %arg18[%c0_101, %c0_102] : memref<1x32xf32, #tpu.memory_space<vmem>>, vector<1x32xf32>
    %176 = vector.broadcast %175 : vector<1x32xf32> to vector<8x32xf32>
    %177 = arith.addf %174, %176 : vector<8x32xf32>
    %c0_103 = arith.constant 0 : index
    %c0_104 = arith.constant 0 : index
    %c0_105 = arith.constant 0 : index
    %178 = vector.load %arg19[%c0_103, %c0_104, %c0_105] : memref<1x8x32xf32, #tpu.memory_space<vmem>>, vector<1x8x32xf32>
    %179 = vector.shape_cast %178 : vector<1x8x32xf32> to vector<8x32xf32>
    %180 = vector.shape_cast %177 : vector<8x32xf32> to vector<1x8x32xf32>
    tpu.vector_store %arg19[%c0_103, %c0_104, %c0_105], %180 {strides = array<i32>} : memref<1x8x32xf32, #tpu.memory_space<vmem>>, vector<1x8x32xf32>,
    return
  }
  func.func @transform_0(%arg0: i32, %arg1: i32) -> (i32, i32, i32) {
    %c0_i32 = arith.constant 0 : i32
    %c0_i32_0 = arith.constant 0 : i32
    %c0_i32_1 = arith.constant 0 : i32
    return %arg0, %c0_i32, %c0_i32_0 : i32, i32, i32
  }
  func.func @transform_1(%arg0: i32, %arg1: i32) -> (i32, i32) {
    %c0_i32 = arith.constant 0 : i32
    %c0_i32_0 = arith.constant 0 : i32
    %c0_i32_1 = arith.constant 0 : i32
    return %c0_i32, %c0_i32_0 : i32, i32
  }
  func.func @transform_2(%arg0: i32, %arg1: i32) -> (i32, i32) {
    %c0_i32 = arith.constant 0 : i32
    %c0_i32_0 = arith.constant 0 : i32
    %c0_i32_1 = arith.constant 0 : i32
    return %c0_i32, %c0_i32_0 : i32, i32
  }
  func.func @transform_3(%arg0: i32, %arg1: i32) -> (i32, i32, i32) {
    %c0_i32 = arith.constant 0 : i32
    %c0_i32_0 = arith.constant 0 : i32
    %c0_i32_1 = arith.constant 0 : i32
    %c0_i32_2 = arith.constant 0 : i32
    return %c0_i32, %c0_i32_0, %c0_i32_1 : i32, i32, i32
  }
  func.func @transform_4(%arg0: i32, %arg1: i32) -> (i32, i32, i32) {
    %c0_i32 = arith.constant 0 : i32
    %c0_i32_0 = arith.constant 0 : i32
    %c0_i32_1 = arith.constant 0 : i32
    %c0_i32_2 = arith.constant 0 : i32
    return %c0_i32, %c0_i32_0, %c0_i32_1 : i32, i32, i32
  }
  func.func @transform_5(%arg0: i32, %arg1: i32) -> (i32, i32) {
    %c0_i32 = arith.constant 0 : i32
    %c0_i32_0 = arith.constant 0 : i32
    %c0_i32_1 = arith.constant 0 : i32
    return %c0_i32, %c0_i32_0 : i32, i32
  }
  func.func @transform_6(%arg0: i32, %arg1: i32) -> (i32, i32) {
    %c0_i32 = arith.constant 0 : i32
    %c0_i32_0 = arith.constant 0 : i32
    %c0_i32_1 = arith.constant 0 : i32
    return %c0_i32, %c0_i32_0 : i32, i32
  }
  func.func @transform_7(%arg0: i32, %arg1: i32) -> (i32, i32) {
    %c0_i32 = arith.constant 0 : i32
    %c0_i32_0 = arith.constant 0 : i32
    %c0_i32_1 = arith.constant 0 : i32
    return %c0_i32, %c0_i32_0 : i32, i32
  }
  func.func @transform_8(%arg0: i32, %arg1: i32) -> (i32, i32) {
    %c0_i32 = arith.constant 0 : i32
    %c0_i32_0 = arith.constant 0 : i32
    %c0_i32_1 = arith.constant 0 : i32
    return %c0_i32, %c0_i32_0 : i32, i32
  }
  func.func @transform_9(%arg0: i32, %arg1: i32) -> (i32, i32) {
    %c0_i32 = arith.constant 0 : i32
    %c0_i32_0 = arith.constant 0 : i32
    %c0_i32_1 = arith.constant 0 : i32
    return %c0_i32, %c0_i32_0 : i32, i32
  }
  func.func @transform_10(%arg0: i32, %arg1: i32) -> (i32, i32) {
    %c0_i32 = arith.constant 0 : i32
    %c0_i32_0 = arith.constant 0 : i32
    %c0_i32_1 = arith.constant 0 : i32
    return %c0_i32, %c0_i32_0 : i32, i32
  }
  func.func @transform_11(%arg0: i32, %arg1: i32) -> (i32, i32) {
    %c0_i32 = arith.constant 0 : i32
    %c0_i32_0 = arith.constant 0 : i32
    %c0_i32_1 = arith.constant 0 : i32
    return %c0_i32, %c0_i32_0 : i32, i32
  }
  func.func @transform_12(%arg0: i32, %arg1: i32) -> (i32, i32) {
    %c0_i32 = arith.constant 0 : i32
    %c0_i32_0 = arith.constant 0 : i32
    %c0_i32_1 = arith.constant 0 : i32
    return %c0_i32, %c0_i32_0 : i32, i32
  }
  func.func @transform_13(%arg0: i32, %arg1: i32) -> (i32, i32) {
    %c0_i32 = arith.constant 0 : i32
    %c0_i32_0 = arith.constant 0 : i32
    %c0_i32_1 = arith.constant 0 : i32
    return %c0_i32, %c0_i32_0 : i32, i32
  }
  func.func @transform_14(%arg0: i32, %arg1: i32) -> (i32, i32) {
    %c0_i32 = arith.constant 0 : i32
    %c0_i32_0 = arith.constant 0 : i32
    %c0_i32_1 = arith.constant 0 : i32
    return %c0_i32, %c0_i32_0 : i32, i32
  }
  func.func @transform_15(%arg0: i32, %arg1: i32) -> (i32, i32) {
    %c0_i32 = arith.constant 0 : i32
    %c0_i32_0 = arith.constant 0 : i32
    %c0_i32_1 = arith.constant 0 : i32
    return %c0_i32, %c0_i32_0 : i32, i32
  }
  func.func @transform_16(%arg0: i32, %arg1: i32) -> (i32, i32) {
    %c0_i32 = arith.constant 0 : i32
    %c0_i32_0 = arith.constant 0 : i32
    %c0_i32_1 = arith.constant 0 : i32
    return %c0_i32, %c0_i32_0 : i32, i32
  }
  func.func @transform_17(%arg0: i32, %arg1: i32) -> (i32, i32, i32) {
    %c0_i32 = arith.constant 0 : i32
    %c0_i32_0 = arith.constant 0 : i32
    return %arg0, %arg1, %c0_i32 : i32, i32, i32
  }
}

</mosaic_0001>

<llo_original>
// kernel: tpu_custom_call.1
$region0: #{tpu_custom_call.1}
  #allocation0 [shape = 'u32[]', space=smem, size = 0x4, offset = 0x4, fixed_abs, tag = 'smem constant byte address 0x4 - core index']
  #allocation1 [shape = 'u32[144,128]{1,0:T(1,128)}', space=vmem, size = 0x12000, scoped, tag = 'internal scratch']
  #allocation2 [shape = 'bf16[8,32]{1,0:T(8,128)(2,1)}', space=vmem, size = 0x800, scoped, tag = 'scratch operand']
  #allocation3 [shape = 'bf16[4,8,8]{2,1,0:T(8,128)(2,1)}', space=vmem, size = 0x2000, scoped, tag = 'scratch operand']
  #allocation4 [shape = 'bf16[4,8,8]{2,1,0:T(8,128)(2,1)}', space=vmem, size = 0x2000, scoped, tag = 'scratch operand']
  #allocation5 [shape = 'f32[8,32]{1,0:T(8,128)}', space=vmem, size = 0x1000, scoped, tag = 'scratch operand']
  %s0 = inlined_call_operand.vmem [shape: f32[2,8,32], index: 0, kind: input, shape index: {}]
  %s1 = inlined_call_operand.vmem [shape: f32[1,32], index: 1, kind: input, shape index: {}]
  %s2 = inlined_call_operand.vmem [shape: f32[1,32], index: 2, kind: input, shape index: {}]
  %s3 = inlined_call_operand.vmem [shape: bf16[4,32,8], index: 3, kind: input, shape index: {}]
  %s4 = inlined_call_operand.vmem [shape: f32[4,1,8], index: 4, kind: input, shape index: {}]
  %s5 = inlined_call_operand.vmem [shape: bf16[32,32], index: 5, kind: input, shape index: {}]
  %s6 = inlined_call_operand.vmem [shape: f32[1,32], index: 6, kind: input, shape index: {}]
  %s7 = inlined_call_operand.vmem [shape: bf16[32,32], index: 7, kind: input, shape index: {}]
  %s8 = inlined_call_operand.vmem [shape: f32[1,32], index: 8, kind: input, shape index: {}]
  %s9 = inlined_call_operand.vmem [shape: f32[1,32], index: 9, kind: input, shape index: {}]
  %s10 = inlined_call_operand.vmem [shape: f32[1,32], index: 10, kind: input, shape index: {}]
  %s11 = inlined_call_operand.vmem [shape: bf16[32,64], index: 11, kind: input, shape index: {}]
  %s12 = inlined_call_operand.vmem [shape: f32[1,64], index: 12, kind: input, shape index: {}]
  %s13 = inlined_call_operand.vmem [shape: f32[1,64], index: 13, kind: input, shape index: {}]
  %s14 = inlined_call_operand.vmem [shape: f32[1,64], index: 14, kind: input, shape index: {}]
  %s15 = inlined_call_operand.vmem [shape: bf16[64,32], index: 15, kind: input, shape index: {}]
  %s16 = inlined_call_operand.vmem [shape: f32[1,32], index: 16, kind: input, shape index: {}]
  %s17 = inlined_call_operand.hbm [shape: f32[2,8,32], index: 17, kind: output, shape index: {}]
  %s18 = sld [smem:[#allocation0]]
  $region105: #{tpu_custom_call.1} parent=0
    _
  %s20 = ssub.s32 1, %s18
  %s21 = scalar_select 0, %s20, %s18
  $region1: #{tpu_custom_call.1} parent=0
    #allocation6 [shape = 'u8[8192]{0}', space=vmem, size = 0x2000, scoped, tag = 'output window, operand 0']
    #allocation7 [shape = 's32[2]{0}', space=sflag, size = 0x8, scoped, tag = 'scoped memory for tpu_custom_call.1']
    %22 = vsyncpa [#allocation7], 0
    %s23 = scalar_lea.sflag [#allocation7], 1
    %24 = vsyncpa %s23, 0
    loop: start=0, step=1, limit=4
    $region2: #{tpu_custom_call.1} parent=1 // loop_pre_header
      _
    $region3: #{tpu_custom_call.1} parent=1 // loop_header
      %s26 = sphi 0, %s30
      %p27 = scmp.ge.s32.totalorder %s26, 4
      %s33 = sphi 0, %s45
      %s34 = sphi 0, %s41
      %s35 = sphi 0, %s33
      %s36 = sphi 0, %s34
      %s37 = sphi 0, %s35
      %s38 = sphi 0, %s36
      %s48 = sphi 0, %s50
      %s51 = sphi 0, %s48
      %s52 = sphi 0, %s51
      %s68 = sphi 0, %s52
      %s72 = sphi 0, %s72
      %s74 = sphi 0, %s72
      %s75 = sphi 0, %s74
      %s89 = sphi 0, %s75
      %s93 = sphi 0, %s93
      %s95 = sphi 0, %s93
      %s96 = sphi 0, %s95
      %s110 = sphi 0, %s96
      %s114 = sphi 0, %s114
      %s116 = sphi 0, %s114
      %s117 = sphi 0, %s116
      %s131 = sphi 0, %s117
      %s135 = sphi 0, %s135
      %s137 = sphi 0, %s135
      %s138 = sphi 0, %s137
      %s152 = sphi 0, %s138
      %s156 = sphi 0, %s156
      %s158 = sphi 0, %s156
      %s159 = sphi 0, %s158
      %s173 = sphi 0, %s159
      %s177 = sphi 0, %s177
      %s179 = sphi 0, %s177
      %s180 = sphi 0, %s179
      %s194 = sphi 0, %s180
      %s198 = sphi 0, %s198
      %s200 = sphi 0, %s198
      %s201 = sphi 0, %s200
      %s215 = sphi 0, %s201
      %s219 = sphi 0, %s219
      %s221 = sphi 0, %s219
      %s222 = sphi 0, %s221
      %s236 = sphi 0, %s222
      %s240 = sphi 0, %s240
      %s242 = sphi 0, %s240
      %s243 = sphi 0, %s242
      %s257 = sphi 0, %s243
      %s261 = sphi 0, %s261
      %s263 = sphi 0, %s261
      %s264 = sphi 0, %s263
      %s278 = sphi 0, %s264
      %s282 = sphi 0, %s282
      %s284 = sphi 0, %s282
      %s285 = sphi 0, %s284
      %s299 = sphi 0, %s285
      %s303 = sphi 0, %s303
      %s305 = sphi 0, %s303
      %s306 = sphi 0, %s305
      %s320 = sphi 0, %s306
      %s324 = sphi 0, %s324
      %s326 = sphi 0, %s324
      %s327 = sphi 0, %s326
      %s341 = sphi 0, %s327
      %s345 = sphi 0, %s345
      %s347 = sphi 0, %s345
      %s348 = sphi 0, %s347
      %s362 = sphi 0, %s348
      %s366 = sphi 0, %s366
      %s368 = sphi 0, %s366
      %s369 = sphi 0, %s368
      %s383 = sphi 0, %s369
      %s387 = sphi 0, %s387
      %s389 = sphi 0, %s387
      %s390 = sphi 0, %s389
      %s404 = sphi 0, %s390
      %s412 = sphi 0, %s414
      %s415 = sphi 0, %s412
      %s416 = sphi 0, %s415
      %s432 = sphi 0, %s416
    $region4: #{tpu_custom_call.1} parent=1 // loop_header_branch
      %29 = sbr.rel (%p27) target = $region8
    $region5: #{tpu_custom_call.1} parent=1 // loop_body
      %s31 = ssub.s32 %s26, 1
      %s32 = ssub.s32 %s26, 2
      %s39 = sadd.s32 1, %s34
      %p40 = scmp.ge.s32.totalorder %s39, 1
      %s41 = scalar_select %p40, 0, %s39
      %s42 = sadd.s32 1, %s33
      %s43 = scalar_select %p40, %s42, %s33
      %p44 = scmp.ge.s32.totalorder %s43, 2
      %s45 = scalar_select %p44, 0, %s43
      %s46 = ssub.s32 %s33, %s45
      %p47 = scmp.eq.s32.totalorder %s46, 0
      %s49 = sadd.s32 %s48, 1
      %s50 = scalar_select %p47, %s48, %s49
      %p53 = pneg %p47
      %p54 = scmp.eq.s32.totalorder %s26, 1
      %p55 = por %p53, %p54
      %p56 = scmp.ne.s32.totalorder %s48, %s51
      %p57 = scmp.eq.s32.totalorder %s26, 0
      %p58 = por %p56, %p57
      %p59 = scmp.ne.s32.totalorder %s48, %s51
      %p60 = scmp.eq.s32.totalorder %s31, 1
      %p61 = por %p59, %p60
      %p62 = scmp.ne.s32.totalorder %s51, %s52
      %p63 = scmp.eq.s32.totalorder %s31, 0
      %p64 = por %p62, %p63
      %p65 = scmp.ne.s32.totalorder %s51, %s52
      %p66 = scmp.eq.s32.totalorder %s32, 1
      %p67 = por %p65, %p66
      %p69 = scmp.ne.s32.totalorder %s52, %s68
      %p70 = scmp.eq.s32.totalorder %s32, 0
      %p71 = por %p69, %p70
      %s73 = sadd.s32 %s72, 1
      %p76 = scmp.eq.s32.totalorder %s26, 1
      %p77 = scmp.ne.s32.totalorder %s72, %s74
      %p78 = scmp.eq.s32.totalorder %s26, 0
      %p79 = por %p77, %p78
      %p80 = scmp.ne.s32.totalorder %s72, %s74
      %p81 = scmp.eq.s32.totalorder %s31, 1
      %p82 = por %p80, %p81
      %p83 = scmp.ne.s32.totalorder %s74, %s75
      %p84 = scmp.eq.s32.totalorder %s31, 0
      %p85 = por %p83, %p84
      %p86 = scmp.ne.s32.totalorder %s74, %s75
      %p87 = scmp.eq.s32.totalorder %s32, 1
      %p88 = por %p86, %p87
      %p90 = scmp.ne.s32.totalorder %s75, %s89
      %p91 = scmp.eq.s32.totalorder %s32, 0
      %p92 = por %p90, %p91
      %s94 = sadd.s32 %s93, 1
      %p97 = scmp.eq.s32.totalorder %s26, 1
      %p98 = scmp.ne.s32.totalorder %s93, %s95
      %p99 = scmp.eq.s32.totalorder %s26, 0
      %p100 = por %p98, %p99
      %p101 = scmp.ne.s32.totalorder %s93, %s95
      %p102 = scmp.eq.s32.totalorder %s31, 1
      %p103 = por %p101, %p102
      %p104 = scmp.ne.s32.totalorder %s95, %s96
      %p105 = scmp.eq.s32.totalorder %s31, 0
      %p106 = por %p104, %p105
      %p107 = scmp.ne.s32.totalorder %s95, %s96
      %p108 = scmp.eq.s32.totalorder %s32, 1
      %p109 = por %p107, %p108
      %p111 = scmp.ne.s32.totalorder %s96, %s110
      %p112 = scmp.eq.s32.totalorder %s32, 0
      %p113 = por %p111, %p112
      %s115 = sadd.s32 %s114, 1
      %p118 = scmp.eq.s32.totalorder %s26, 1
      %p119 = scmp.ne.s32.totalorder %s114, %s116
      %p120 = scmp.eq.s32.totalorder %s26, 0
      %p121 = por %p119, %p120
      %p122 = scmp.ne.s32.totalorder %s114, %s116
      %p123 = scmp.eq.s32.totalorder %s31, 1
      %p124 = por %p122, %p123
      %p125 = scmp.ne.s32.totalorder %s116, %s117
      %p126 = scmp.eq.s32.totalorder %s31, 0
      %p127 = por %p125, %p126
      %p128 = scmp.ne.s32.totalorder %s116, %s117
      %p129 = scmp.eq.s32.totalorder %s32, 1
      %p130 = por %p128, %p129
      %p132 = scmp.ne.s32.totalorder %s117, %s131
      %p133 = scmp.eq.s32.totalorder %s32, 0
      %p134 = por %p132, %p133
      %s136 = sadd.s32 %s135, 1
      %p139 = scmp.eq.s32.totalorder %s26, 1
      %p140 = scmp.ne.s32.totalorder %s135, %s137
      %p141 = scmp.eq.s32.totalorder %s26, 0
      %p142 = por %p140, %p141
      %p143 = scmp.ne.s32.totalorder %s135, %s137
      %p144 = scmp.eq.s32.totalorder %s31, 1
      %p145 = por %p143, %p144
      %p146 = scmp.ne.s32.totalorder %s137, %s138
      %p147 = scmp.eq.s32.totalorder %s31, 0
      %p148 = por %p146, %p147
      %p149 = scmp.ne.s32.totalorder %s137, %s138
      %p150 = scmp.eq.s32.totalorder %s32, 1
      %p151 = por %p149, %p150
      %p153 = scmp.ne.s32.totalorder %s138, %s152
      %p154 = scmp.eq.s32.totalorder %s32, 0
      %p155 = por %p153, %p154
      %s157 = sadd.s32 %s156, 1
      %p160 = scmp.eq.s32.totalorder %s26, 1
      %p161 = scmp.ne.s32.totalorder %s156, %s158
      %p162 = scmp.eq.s32.totalorder %s26, 0
      %p163 = por %p161, %p162
      %p164 = scmp.ne.s32.totalorder %s156, %s158
      %p165 = scmp.eq.s32.totalorder %s31, 1
      %p166 = por %p164, %p165
      %p167 = scmp.ne.s32.totalorder %s158, %s159
      %p168 = scmp.eq.s32.totalorder %s31, 0
      %p169 = por %p167, %p168
      %p170 = scmp.ne.s32.totalorder %s158, %s159
      %p171 = scmp.eq.s32.totalorder %s32, 1
      %p172 = por %p170, %p171
      %p174 = scmp.ne.s32.totalorder %s159, %s173
      %p175 = scmp.eq.s32.totalorder %s32, 0
      %p176 = por %p174, %p175
      %s178 = sadd.s32 %s177, 1
      %p181 = scmp.eq.s32.totalorder %s26, 1
      %p182 = scmp.ne.s32.totalorder %s177, %s179
      %p183 = scmp.eq.s32.totalorder %s26, 0
      %p184 = por %p182, %p183
      %p185 = scmp.ne.s32.totalorder %s177, %s179
      %p186 = scmp.eq.s32.totalorder %s31, 1
      %p187 = por %p185, %p186
      %p188 = scmp.ne.s32.totalorder %s179, %s180
      %p189 = scmp.eq.s32.totalorder %s31, 0
      %p190 = por %p188, %p189
      %p191 = scmp.ne.s32.totalorder %s179, %s180
      %p192 = scmp.eq.s32.totalorder %s32, 1
      %p193 = por %p191, %p192
      %p195 = scmp.ne.s32.totalorder %s180, %s194
      %p196 = scmp.eq.s32.totalorder %s32, 0
      %p197 = por %p195, %p196
      %s199 = sadd.s32 %s198, 1
      %p202 = scmp.eq.s32.totalorder %s26, 1
      %p203 = scmp.ne.s32.totalorder %s198, %s200
      %p204 = scmp.eq.s32.totalorder %s26, 0
      %p205 = por %p203, %p204
      %p206 = scmp.ne.s32.totalorder %s198, %s200
      %p207 = scmp.eq.s32.totalorder %s31, 1
      %p208 = por %p206, %p207
      %p209 = scmp.ne.s32.totalorder %s200, %s201
      %p210 = scmp.eq.s32.totalorder %s31, 0
      %p211 = por %p209, %p210
      %p212 = scmp.ne.s32.totalorder %s200, %s201
      %p213 = scmp.eq.s32.totalorder %s32, 1
      %p214 = por %p212, %p213
      %p216 = scmp.ne.s32.totalorder %s201, %s215
      %p217 = scmp.eq.s32.totalorder %s32, 0
      %p218 = por %p216, %p217
      %s220 = sadd.s32 %s219, 1
      %p223 = scmp.eq.s32.totalorder %s26, 1
      %p224 = scmp.ne.s32.totalorder %s219, %s221
      %p225 = scmp.eq.s32.totalorder %s26, 0
      %p226 = por %p224, %p225
      %p227 = scmp.ne.s32.totalorder %s219, %s221
      %p228 = scmp.eq.s32.totalorder %s31, 1
      %p229 = por %p227, %p228
      %p230 = scmp.ne.s32.totalorder %s221, %s222
      %p231 = scmp.eq.s32.totalorder %s31, 0
      %p232 = por %p230, %p231
      %p233 = scmp.ne.s32.totalorder %s221, %s222
      %p234 = scmp.eq.s32.totalorder %s32, 1
      %p235 = por %p233, %p234
      %p237 = scmp.ne.s32.totalorder %s222, %s236
      %p238 = scmp.eq.s32.totalorder %s32, 0
      %p239 = por %p237, %p238
      %s241 = sadd.s32 %s240, 1
      %p244 = scmp.eq.s32.totalorder %s26, 1
      %p245 = scmp.ne.s32.totalorder %s240, %s242
      %p246 = scmp.eq.s32.totalorder %s26, 0
      %p247 = por %p245, %p246
      %p248 = scmp.ne.s32.totalorder %s240, %s242
      %p249 = scmp.eq.s32.totalorder %s31, 1
      %p250 = por %p248, %p249
      %p251 = scmp.ne.s32.totalorder %s242, %s243
      %p252 = scmp.eq.s32.totalorder %s31, 0
      %p253 = por %p251, %p252
      %p254 = scmp.ne.s32.totalorder %s242, %s243
      %p255 = scmp.eq.s32.totalorder %s32, 1
      %p256 = por %p254, %p255
      %p258 = scmp.ne.s32.totalorder %s243, %s257
      %p259 = scmp.eq.s32.totalorder %s32, 0
      %p260 = por %p258, %p259
      %s262 = sadd.s32 %s261, 1
      %p265 = scmp.eq.s32.totalorder %s26, 1
      %p266 = scmp.ne.s32.totalorder %s261, %s263
      %p267 = scmp.eq.s32.totalorder %s26, 0
      %p268 = por %p266, %p267
      %p269 = scmp.ne.s32.totalorder %s261, %s263
      %p270 = scmp.eq.s32.totalorder %s31, 1
      %p271 = por %p269, %p270
      %p272 = scmp.ne.s32.totalorder %s263, %s264
      %p273 = scmp.eq.s32.totalorder %s31, 0
      %p274 = por %p272, %p273
      %p275 = scmp.ne.s32.totalorder %s263, %s264
      %p276 = scmp.eq.s32.totalorder %s32, 1
      %p277 = por %p275, %p276
      %p279 = scmp.ne.s32.totalorder %s264, %s278
      %p280 = scmp.eq.s32.totalorder %s32, 0
      %p281 = por %p279, %p280
      %s283 = sadd.s32 %s282, 1
      %p286 = scmp.eq.s32.totalorder %s26, 1
      %p287 = scmp.ne.s32.totalorder %s282, %s284
      %p288 = scmp.eq.s32.totalorder %s26, 0
      %p289 = por %p287, %p288
      %p290 = scmp.ne.s32.totalorder %s282, %s284
      %p291 = scmp.eq.s32.totalorder %s31, 1
      %p292 = por %p290, %p291
      %p293 = scmp.ne.s32.totalorder %s284, %s285
      %p294 = scmp.eq.s32.totalorder %s31, 0
      %p295 = por %p293, %p294
      %p296 = scmp.ne.s32.totalorder %s284, %s285
      %p297 = scmp.eq.s32.totalorder %s32, 1
      %p298 = por %p296, %p297
      %p300 = scmp.ne.s32.totalorder %s285, %s299
      %p301 = scmp.eq.s32.totalorder %s32, 0
      %p302 = por %p300, %p301
      %s304 = sadd.s32 %s303, 1
      %p307 = scmp.eq.s32.totalorder %s26, 1
      %p308 = scmp.ne.s32.totalorder %s303, %s305
      %p309 = scmp.eq.s32.totalorder %s26, 0
      %p310 = por %p308, %p309
      %p311 = scmp.ne.s32.totalorder %s303, %s305
      %p312 = scmp.eq.s32.totalorder %s31, 1
      %p313 = por %p311, %p312
      %p314 = scmp.ne.s32.totalorder %s305, %s306
      %p315 = scmp.eq.s32.totalorder %s31, 0
      %p316 = por %p314, %p315
      %p317 = scmp.ne.s32.totalorder %s305, %s306
      %p318 = scmp.eq.s32.totalorder %s32, 1
      %p319 = por %p317, %p318
      %p321 = scmp.ne.s32.totalorder %s306, %s320
      %p322 = scmp.eq.s32.totalorder %s32, 0
      %p323 = por %p321, %p322
      %s325 = sadd.s32 %s324, 1
      %p328 = scmp.eq.s32.totalorder %s26, 1
      %p329 = scmp.ne.s32.totalorder %s324, %s326
      %p330 = scmp.eq.s32.totalorder %s26, 0
      %p331 = por %p329, %p330
      %p332 = scmp.ne.s32.totalorder %s324, %s326
      %p333 = scmp.eq.s32.totalorder %s31, 1
      %p334 = por %p332, %p333
      %p335 = scmp.ne.s32.totalorder %s326, %s327
      %p336 = scmp.eq.s32.totalorder %s31, 0
      %p337 = por %p335, %p336
      %p338 = scmp.ne.s32.totalorder %s326, %s327
      %p339 = scmp.eq.s32.totalorder %s32, 1
      %p340 = por %p338, %p339
      %p342 = scmp.ne.s32.totalorder %s327, %s341
      %p343 = scmp.eq.s32.totalorder %s32, 0
      %p344 = por %p342, %p343
      %s346 = sadd.s32 %s345, 1
      %p349 = scmp.eq.s32.totalorder %s26, 1
      %p350 = scmp.ne.s32.totalorder %s345, %s347
      %p351 = scmp.eq.s32.totalorder %s26, 0
      %p352 = por %p350, %p351
      %p353 = scmp.ne.s32.totalorder %s345, %s347
      %p354 = scmp.eq.s32.totalorder %s31, 1
      %p355 = por %p353, %p354
      %p356 = scmp.ne.s32.totalorder %s347, %s348
      %p357 = scmp.eq.s32.totalorder %s31, 0
      %p358 = por %p356, %p357
      %p359 = scmp.ne.s32.totalorder %s347, %s348
      %p360 = scmp.eq.s32.totalorder %s32, 1
      %p361 = por %p359, %p360
      %p363 = scmp.ne.s32.totalorder %s348, %s362
      %p364 = scmp.eq.s32.totalorder %s32, 0
      %p365 = por %p363, %p364
      %s367 = sadd.s32 %s366, 1
      %p370 = scmp.eq.s32.totalorder %s26, 1
      %p371 = scmp.ne.s32.totalorder %s366, %s368
      %p372 = scmp.eq.s32.totalorder %s26, 0
      %p373 = por %p371, %p372
      %p374 = scmp.ne.s32.totalorder %s366, %s368
      %p375 = scmp.eq.s32.totalorder %s31, 1
      %p376 = por %p374, %p375
      %p377 = scmp.ne.s32.totalorder %s368, %s369
      %p378 = scmp.eq.s32.totalorder %s31, 0
      %p379 = por %p377, %p378
      %p380 = scmp.ne.s32.totalorder %s368, %s369
      %p381 = scmp.eq.s32.totalorder %s32, 1
      %p382 = por %p380, %p381
      %p384 = scmp.ne.s32.totalorder %s369, %s383
      %p385 = scmp.eq.s32.totalorder %s32, 0
      %p386 = por %p384, %p385
      %s388 = sadd.s32 %s387, 1
      %p391 = scmp.eq.s32.totalorder %s26, 1
      %p392 = scmp.ne.s32.totalorder %s387, %s389
      %p393 = scmp.eq.s32.totalorder %s26, 0
      %p394 = por %p392, %p393
      %p395 = scmp.ne.s32.totalorder %s387, %s389
      %p396 = scmp.eq.s32.totalorder %s31, 1
      %p397 = por %p395, %p396
      %p398 = scmp.ne.s32.totalorder %s389, %s390
      %p399 = scmp.eq.s32.totalorder %s31, 0
      %p400 = por %p398, %p399
      %p401 = scmp.ne.s32.totalorder %s389, %s390
      %p402 = scmp.eq.s32.totalorder %s32, 1
      %p403 = por %p401, %p402
      %p405 = scmp.ne.s32.totalorder %s390, %s404
      %p406 = scmp.eq.s32.totalorder %s32, 0
      %p407 = por %p405, %p406
      %s408 = ssub.s32 %s33, %s45
      %s409 = ssub.s32 %s34, %s41
      %s410 = sor.u32 %s408, %s409
      %p411 = scmp.eq.s32.totalorder %s410, 0
      %s413 = sadd.s32 %s412, 1
      %s414 = scalar_select %p411, %s412, %s413
      %p417 = pneg %p411
      %p418 = scmp.eq.s32.totalorder %s26, 1
      %p419 = por %p417, %p418
      %p420 = scmp.ne.s32.totalorder %s412, %s415
      %p421 = scmp.eq.s32.totalorder %s26, 0
      %p422 = por %p420, %p421
      %p423 = scmp.ne.s32.totalorder %s412, %s415
      %p424 = scmp.eq.s32.totalorder %s31, 1
      %p425 = por %p423, %p424
      %p426 = scmp.ne.s32.totalorder %s415, %s416
      %p427 = scmp.eq.s32.totalorder %s31, 0
      %p428 = por %p426, %p427
      %p429 = scmp.ne.s32.totalorder %s415, %s416
      %p430 = scmp.eq.s32.totalorder %s32, 1
      %p431 = por %p429, %p430
      %p433 = scmp.ne.s32.totalorder %s416, %s432
      %p434 = scmp.eq.s32.totalorder %s32, 0
      %p435 = por %p433, %p434
      %p436 = scmp.le.s32.totalorder 1, %s26
      %p437 = scmp.lt.s32.totalorder %s26, 3
      %p438 = pnand %p436, %p437
      %p439 = pneg %p438
      // Predicated region
      $region9: #{tpu_custom_call.1} parent=5 // pred_check
        _
      $region10: #{tpu_custom_call.1} parent=5 // pred_check_branch
        %441 = sbr.rel (%p438) target = $region12
      $region11: #{tpu_custom_call.1} parent=5 // pred_region
        %s442 = ssub.s32 %s26, 1
        // Predicated region
        $region13: #{tpu_custom_call.1} parent=11 // pred_check
          %p443 = pneg %p85
        $region14: #{tpu_custom_call.1} parent=11 // pred_check_branch
          %445 = sbr.rel (%p443) target = $region16
        $region15: #{tpu_custom_call.1} parent=11 // pred_region
          _
        $region16: #{tpu_custom_call.1} parent=11 // pred_fallthru
          _
        // Predicated region
        $region17: #{tpu_custom_call.1} parent=11 // pred_check
          %p446 = pneg %p106
        $region18: #{tpu_custom_call.1} parent=11 // pred_check_branch
          %448 = sbr.rel (%p446) target = $region20
        $region19: #{tpu_custom_call.1} parent=11 // pred_region
          _
        $region20: #{tpu_custom_call.1} parent=11 // pred_fallthru
          _
        // Predicated region
        $region21: #{tpu_custom_call.1} parent=11 // pred_check
          %p449 = pneg %p127
        $region22: #{tpu_custom_call.1} parent=11 // pred_check_branch
          %451 = sbr.rel (%p449) target = $region24
        $region23: #{tpu_custom_call.1} parent=11 // pred_region
          _
        $region24: #{tpu_custom_call.1} parent=11 // pred_fallthru
          _
        // Predicated region
        $region25: #{tpu_custom_call.1} parent=11 // pred_check
          %p452 = pneg %p148
        $region26: #{tpu_custom_call.1} parent=11 // pred_check_branch
          %454 = sbr.rel (%p452) target = $region28
        $region27: #{tpu_custom_call.1} parent=11 // pred_region
          _
        $region28: #{tpu_custom_call.1} parent=11 // pred_fallthru
          _
        // Predicated region
        $region29: #{tpu_custom_call.1} parent=11 // pred_check
          %p455 = pneg %p169
        $region30: #{tpu_custom_call.1} parent=11 // pred_check_branch
          %457 = sbr.rel (%p455) target = $region32
        $region31: #{tpu_custom_call.1} parent=11 // pred_region
          _
        $region32: #{tpu_custom_call.1} parent=11 // pred_fallthru
          _
        // Predicated region
        $region33: #{tpu_custom_call.1} parent=11 // pred_check
          %p458 = pneg %p190
        $region34: #{tpu_custom_call.1} parent=11 // pred_check_branch
          %460 = sbr.rel (%p458) target = $region36
        $region35: #{tpu_custom_call.1} parent=11 // pred_region
          _
        $region36: #{tpu_custom_call.1} parent=11 // pred_fallthru
          _
        // Predicated region
        $region37: #{tpu_custom_call.1} parent=11 // pred_check
          %p461 = pneg %p211
        $region38: #{tpu_custom_call.1} parent=11 // pred_check_branch
          %463 = sbr.rel (%p461) target = $region40
        $region39: #{tpu_custom_call.1} parent=11 // pred_region
          _
        $region40: #{tpu_custom_call.1} parent=11 // pred_fallthru
          _
        // Predicated region
        $region41: #{tpu_custom_call.1} parent=11 // pred_check
          %p464 = pneg %p232
        $region42: #{tpu_custom_call.1} parent=11 // pred_check_branch
          %466 = sbr.rel (%p464) target = $region44
        $region43: #{tpu_custom_call.1} parent=11 // pred_region
          _
        $region44: #{tpu_custom_call.1} parent=11 // pred_fallthru
          _
        // Predicated region
        $region45: #{tpu_custom_call.1} parent=11 // pred_check
          %p467 = pneg %p253
        $region46: #{tpu_custom_call.1} parent=11 // pred_check_branch
          %469 = sbr.rel (%p467) target = $region48
        $region47: #{tpu_custom_call.1} parent=11 // pred_region
          _
        $region48: #{tpu_custom_call.1} parent=11 // pred_fallthru
          _
        // Predicated region
        $region49: #{tpu_custom_call.1} parent=11 // pred_check
          %p470 = pneg %p274
        $region50: #{tpu_custom_call.1} parent=11 // pred_check_branch
          %472 = sbr.rel (%p470) target = $region52
        $region51: #{tpu_custom_call.1} parent=11 // pred_region
          _
        $region52: #{tpu_custom_call.1} parent=11 // pred_fallthru
          _
        // Predicated region
        $region53: #{tpu_custom_call.1} parent=11 // pred_check
          %p473 = pneg %p295
        $region54: #{tpu_custom_call.1} parent=11 // pred_check_branch
          %475 = sbr.rel (%p473) target = $region56
        $region55: #{tpu_custom_call.1} parent=11 // pred_region
          _
        $region56: #{tpu_custom_call.1} parent=11 // pred_fallthru
          _
        // Predicated region
        $region57: #{tpu_custom_call.1} parent=11 // pred_check
          %p476 = pneg %p316
        $region58: #{tpu_custom_call.1} parent=11 // pred_check_branch
          %478 = sbr.rel (%p476) target = $region60
        $region59: #{tpu_custom_call.1} parent=11 // pred_region
          _
        $region60: #{tpu_custom_call.1} parent=11 // pred_fallthru
          _
        // Predicated region
        $region61: #{tpu_custom_call.1} parent=11 // pred_check
          %p479 = pneg %p337
        $region62: #{tpu_custom_call.1} parent=11 // pred_check_branch
          %481 = sbr.rel (%p479) target = $region64
        $region63: #{tpu_custom_call.1} parent=11 // pred_region
          _
        $region64: #{tpu_custom_call.1} parent=11 // pred_fallthru
          _
        // Predicated region
        $region65: #{tpu_custom_call.1} parent=11 // pred_check
          %p482 = pneg %p358
        $region66: #{tpu_custom_call.1} parent=11 // pred_check_branch
          %484 = sbr.rel (%p482) target = $region68
        $region67: #{tpu_custom_call.1} parent=11 // pred_region
          _
        $region68: #{tpu_custom_call.1} parent=11 // pred_fallthru
          _
        // Predicated region
        $region69: #{tpu_custom_call.1} parent=11 // pred_check
          %p485 = pneg %p379
        $region70: #{tpu_custom_call.1} parent=11 // pred_check_branch
          %487 = sbr.rel (%p485) target = $region72
        $region71: #{tpu_custom_call.1} parent=11 // pred_region
          _
        $region72: #{tpu_custom_call.1} parent=11 // pred_fallthru
          _
        // Predicated region
        $region73: #{tpu_custom_call.1} parent=11 // pred_check
          %p488 = pneg %p400
        $region74: #{tpu_custom_call.1} parent=11 // pred_check_branch
          %490 = sbr.rel (%p488) target = $region76
        $region75: #{tpu_custom_call.1} parent=11 // pred_region
          _
        $region76: #{tpu_custom_call.1} parent=11 // pred_fallthru
          _
      $region12: #{tpu_custom_call.1} parent=5 // pred_fallthru
        _
      %p491 = scmp.lt.s32.totalorder %s26, 2
      // Predicated region
      $region77: #{tpu_custom_call.1} parent=5 // pred_check
        %p492 = pneg %p491
      $region78: #{tpu_custom_call.1} parent=5 // pred_check_branch
        %494 = sbr.rel (%p492) target = $region80
      $region79: #{tpu_custom_call.1} parent=5 // pred_region
        // Predicated region
        $region81: #{tpu_custom_call.1} parent=79 // pred_check
          %p495 = pneg %p58
        $region82: #{tpu_custom_call.1} parent=79 // pred_check_branch
          %497 = sbr.rel (%p495) target = $region84
        $region83: #{tpu_custom_call.1} parent=79 // pred_region
          %p498 = scmp.lt.s32.totalorder %s33, 1
          %s499 = scalar_select %p498, %s33, 1
          %s500 = smul.addr %s499, 8
          %s501 = scalar_lea.vmem %s0, %s500
        $region84: #{tpu_custom_call.1} parent=79 // pred_fallthru
          _
      $region80: #{tpu_custom_call.1} parent=5 // pred_fallthru
        _
      %p502 = scmp.le.s32.totalorder 1, %s26
      %p503 = scmp.lt.s32.totalorder %s26, 3
      %p504 = pnand %p502, %p503
      %p505 = pneg %p504
      // Predicated region
      $region85: #{tpu_custom_call.1} parent=5 // pred_check
        _
      $region86: #{tpu_custom_call.1} parent=5 // pred_check_branch
        %507 = sbr.rel (%p504) target = $region88
      $region87: #{tpu_custom_call.1} parent=5 // pred_region
        %s508 = ssub.s32 %s26, 1
        %p509 = scmp.lt.s32.totalorder %s35, 1
        %s510 = scalar_select %p509, %s35, 1
        %s511 = smul.addr %s510, 8
        %s512 = scalar_lea.vmem %s0, %s511
        %p513 = pneg %p64
        %p514 = pneg %p61
        %p515 = pneg %p85
        %p516 = pneg %p82
        %p517 = pneg %p106
        %p518 = pneg %p103
        %p519 = pneg %p127
        %p520 = pneg %p124
        %p521 = pneg %p148
        %p522 = pneg %p145
        %p523 = pneg %p169
        %p524 = pneg %p166
        %p525 = pneg %p190
        %p526 = pneg %p187
        %p527 = pneg %p211
        %p528 = pneg %p208
        %p529 = pneg %p232
        %p530 = pneg %p229
        %p531 = pneg %p253
        %p532 = pneg %p250
        %p533 = pneg %p274
        %p534 = pneg %p271
        %p535 = pneg %p295
        %p536 = pneg %p292
        %p537 = pneg %p316
        %p538 = pneg %p313
        %p539 = pneg %p337
        %p540 = pneg %p334
        %p541 = pneg %p358
        %p542 = pneg %p355
        %p543 = pneg %p379
        %p544 = pneg %p376
        %p545 = pneg %p400
        %p546 = pneg %p397
        %p547 = pneg %p428
        %p548 = pneg %p425
        %s549 = sand.u32 %s415, 1
        %s550 = scalar_lea.sflag [#allocation7], %s549
        %s551 = sand.u32 %s415, 1
        %s552 = smul.addr %s551, 8
        %s553 = scalar_lea.vmem [#allocation6], %s552
        %p554 = scmp.lt.s32.totalorder %s35, 1
        %s555 = scalar_select %p554, %s35, 1
        %s556 = smul.addr %s555, 8
        %s557 = scalar_lea.vmem %s0, %s556
        %p559 = scmp.eq.s32.totalorder %s36, 0
        // Predicated region
        $region89: #{tpu_custom_call.1} parent=87 // pred_check
          %p560 = pneg %p559
        $region90: #{tpu_custom_call.1} parent=87 // pred_check_branch
          %562 = sbr.rel (%p560) target = $region92
        $region91: #{tpu_custom_call.1} parent=87 // pred_region
          %v563 = vld [vmem:[%s557] sm:$0xff]
          %v564 = vld [vmem:[%s1] sm:$0x1]
          %v565 = vld [vmem:[%s2] sm:$0x1]
          %vm566 = vcmask 261120
          %v567 = vsel %vm566, %v563, 0.0
          %568 = vadd.xlane.f32.xlu0 %v567
          %v569 = vpop.xlane.xlu0 %568
          %v570 = vrcp.pop 32.0
          %v571 = vmul.f32 %v569, %v570
          %v572 = vsub.f32 %v563, %v571
          %v573 = vmul.f32 %v572, %v572
          %v574 = vsel %vm566, %v573, 0.0
          %575 = vadd.xlane.f32.xlu0 %v574
          %v576 = vpop.xlane.xlu0 %575
          %v577 = vmul.f32 %v576, %v570
          %v578 = vadd.f32 %v577, 1e-05
          %v579 = vrsqrt.pop %v578
          %v580 = vmul.f32 %v572, %v579
          %v582 = vlaneseq
          %v583 = vshrl.u32 %v582, 7
          %v584 = vsub.s32 0, %v583
          %v585 = vrot.slane %v564, %v584
          %v587 = vmul.f32 %v580, %v585
          %v589 = vlaneseq
          %v590 = vshrl.u32 %v589, 7
          %v591 = vsub.s32 0, %v590
          %v592 = vrot.slane %v565, %v591
          %v594 = vadd.f32 %v587, %v592
          %v595 = vpack.c.bf16 %v594, %v594
          %vm596 = vcmask 257024
          %597 = vst.msk [vmem:[#allocation2] sm:$0xf] %vm596, %v595
          %v598 = vld [vmem:[%s5] sm:$0xf]
          %v599 = vld [vmem:[%s5 + $0x4] sm:$0xf]
          %v600 = vld [vmem:[%s5 + $0x8] sm:$0xf]
          %v601 = vld [vmem:[%s5 + $0xc] sm:$0xf]
          %v602 = vld [vmem:[%s6] sm:$0x1]
          %v604 = vlaneseq
          %v605 = vshrl.u32 %v604, 7
          %v606 = vsub.s32 0, %v605
          %v607 = vrot.slane %v602, %v606
          %v613 = vunpack.c.l.b16 %v598
          %v614 = vunpack.c.l.b16 %v599
          %v615 = vunpack.c.l.b16 %v600
          %v616 = vunpack.c.l.b16 %v601
          %v617 = vpack.c.b16 %v614, %v613
          %v618 = vpack.c.b16 %v616, %v615
          %v622 = vsel %vm566, %v595, 0
          %624 = vmatprep.subr.bf16.mxu0 0
          %625 = vmatpush1.bf16.msra.mxu0 %v617
          %626 = vmatprep.subr.bf16.mxu0 0
          %627 = vmatpush1.bf16.msra.mxu0 %v618
          %628 = vmatprep.subr.bf16.mxu0 0
          %629 = vmatpush1.bf16.msra.mxu0 0
          %630 = vmatprep.subr.bf16.mxu0 0
          %631 = vmatpush1.bf16.msra.mxu0 0
          %632 = vmatprep.subr.bf16.mxu0 0
          %633 = vmatpush1.bf16.msra.mxu0 0
          %634 = vmatprep.subr.bf16.mxu0 0
          %635 = vmatpush1.bf16.msra.mxu0 0
          %636 = vmatprep.subr.bf16.mxu0 0
          %637 = vmatpush1.bf16.msra.mxu0 0
          %638 = vmatprep.subr.bf16.mxu0 0
          %639 = vmatpush1.bf16.msra.mxu0 0
          %640 = vmatprep.subr.bf16.mxu0 0
          %641 = vmatpush1.bf16.msra.mxu0 0
          %642 = vmatprep.subr.bf16.mxu0 0
          %643 = vmatpush1.bf16.msra.mxu0 0
          %644 = vmatprep.subr.bf16.mxu0 0
          %645 = vmatpush1.bf16.msra.mxu0 0
          %646 = vmatprep.subr.bf16.mxu0 0
          %647 = vmatpush1.bf16.msra.mxu0 0
          %648 = vmatprep.subr.bf16.mxu0 0
          %649 = vmatpush1.bf16.msra.mxu0 0
          %650 = vmatprep.subr.bf16.mxu0 0
          %651 = vmatpush1.bf16.msra.mxu0 0
          %652 = vmatprep.subr.bf16.mxu0 0
          %653 = vmatpush1.bf16.msra.mxu0 0
          %654 = vmatprep.subr.bf16.mxu0 0
          %655 = vmatpush1.bf16.msra.mxu0 0
          %656 = vmatprep.mubr.bf16.mxu0 0
          %657 = vmatmul.mubr.bf16.gmra.mrb[0].mxu0 %v622
          %v658 = vpop.f32.mrb[0].mxu0
          %v659 = vadd.f32 %v607, %v658
          %v660 = vpop.f32.mrb[0].mxu0
          %v661 = vpop.f32.mrb[0].mxu0
          %v662 = vpop.f32.mrb[0].mxu0
          %663 = vdwg.mxu0
          %v664 = vpack.c.bf16 %v659, %v659
          %v665 = vld [vmem:[%s7] sm:$0xf]
          %v666 = vld [vmem:[%s7 + $0x4] sm:$0xf]
          %v667 = vld [vmem:[%s7 + $0x8] sm:$0xf]
          %v668 = vld [vmem:[%s7 + $0xc] sm:$0xf]
          %v669 = vld [vmem:[%s8] sm:$0x1]
          %v671 = vlaneseq
          %v672 = vshrl.u32 %v671, 7
          %v673 = vsub.s32 0, %v672
          %v674 = vrot.slane %v669, %v673
          %v680 = vunpack.c.l.b16 %v665
          %v681 = vunpack.c.l.b16 %v666
          %v682 = vunpack.c.l.b16 %v667
          %v683 = vunpack.c.l.b16 %v668
          %v684 = vpack.c.b16 %v681, %v680
          %v685 = vpack.c.b16 %v683, %v682
          %688 = vmatprep.subr.bf16.mxu0 0
          %689 = vmatpush1.bf16.msra.mxu0 %v684
          %690 = vmatprep.subr.bf16.mxu0 0
          %691 = vmatpush1.bf16.msra.mxu0 %v685
          %692 = vmatprep.subr.bf16.mxu0 0
          %693 = vmatpush1.bf16.msra.mxu0 0
          %694 = vmatprep.subr.bf16.mxu0 0
          %695 = vmatpush1.bf16.msra.mxu0 0
          %696 = vmatprep.subr.bf16.mxu0 0
          %697 = vmatpush1.bf16.msra.mxu0 0
          %698 = vmatprep.subr.bf16.mxu0 0
          %699 = vmatpush1.bf16.msra.mxu0 0
          %700 = vmatprep.subr.bf16.mxu0 0
          %701 = vmatpush1.bf16.msra.mxu0 0
          %702 = vmatprep.subr.bf16.mxu0 0
          %703 = vmatpush1.bf16.msra.mxu0 0
          %704 = vmatprep.subr.bf16.mxu0 0
          %705 = vmatpush1.bf16.msra.mxu0 0
          %706 = vmatprep.subr.bf16.mxu0 0
          %707 = vmatpush1.bf16.msra.mxu0 0
          %708 = vmatprep.subr.bf16.mxu0 0
          %709 = vmatpush1.bf16.msra.mxu0 0
          %710 = vmatprep.subr.bf16.mxu0 0
          %711 = vmatpush1.bf16.msra.mxu0 0
          %712 = vmatprep.subr.bf16.mxu0 0
          %713 = vmatpush1.bf16.msra.mxu0 0
          %714 = vmatprep.subr.bf16.mxu0 0
          %715 = vmatpush1.bf16.msra.mxu0 0
          %716 = vmatprep.subr.bf16.mxu0 0
          %717 = vmatpush1.bf16.msra.mxu0 0
          %718 = vmatprep.subr.bf16.mxu0 0
          %719 = vmatpush1.bf16.msra.mxu0 0
          %720 = vmatprep.mubr.bf16.mxu0 0
          %721 = vmatmul.mubr.bf16.gmra.mrb[0].mxu0 %v622
          %v722 = vpop.f32.mrb[0].mxu0
          %v723 = vadd.f32 %v674, %v722
          %v724 = vpop.f32.mrb[0].mxu0
          %v725 = vpop.f32.mrb[0].mxu0
          %v726 = vpop.f32.mrb[0].mxu0
          %727 = vdwg.mxu0
          %v728 = vpack.c.bf16 %v723, %v723
          %vm729 = vcmask 60416
          %730 = vst.msk [vmem:[#allocation3] sm:$0xf] %vm729, %v664
          %731 = vst.msk [vmem:[#allocation4] sm:$0xf] %vm729, %v728
          %v733 = vunpack.c.l.b16 %v664
          %v734 = vpack.c.b16 %v733, %v733
          %735 = vrot.lane.b32.xlu0 %v734, 120
          %v736 = vpop.permute.xlu0 %735
          %s738 = scalar_lea.vmem [#allocation3], 4
          %739 = vst.msk [vmem:[%s738] sm:$0xf] %vm729, %v736
          %v741 = vunpack.c.l.b16 %v728
          %v742 = vpack.c.b16 %v741, %v741
          %743 = vrot.lane.b32.xlu0 %v742, 120
          %v744 = vpop.permute.xlu0 %743
          %s746 = scalar_lea.vmem [#allocation4], 4
          %747 = vst.msk [vmem:[%s746] sm:$0xf] %vm729, %v744
          %748 = vrot.lane.b32.xlu0 %v734, 112
          %v749 = vpop.permute.xlu0 %748
          %s751 = scalar_lea.vmem [#allocation3], 8
          %752 = vst.msk [vmem:[%s751] sm:$0xf] %vm729, %v749
          %753 = vrot.lane.b32.xlu0 %v742, 112
          %v754 = vpop.permute.xlu0 %753
          %s756 = scalar_lea.vmem [#allocation4], 8
          %757 = vst.msk [vmem:[%s756] sm:$0xf] %vm729, %v754
          %758 = vrot.lane.b32.xlu0 %v734, 104
          %v759 = vpop.permute.xlu0 %758
          %s761 = scalar_lea.vmem [#allocation3], 12
          %762 = vst.msk [vmem:[%s761] sm:$0xf] %vm729, %v759
          %763 = vrot.lane.b32.xlu0 %v742, 104
          %v764 = vpop.permute.xlu0 %763
          %s766 = scalar_lea.vmem [#allocation4], 12
          %767 = vst.msk [vmem:[%s766] sm:$0xf] %vm729, %v764
        $region92: #{tpu_custom_call.1} parent=87 // pred_fallthru
          _
        %s768 = smul.u32 %s36, 8
        %s769 = scalar_lea.vmem %s557, %s768
        %v770 = vld [vmem:[%s769] sm:$0xff]
        %s771 = sshra.s32 %s768, 3
        %s772 = sand.u32 %s768, 7
        %s773 = smul.addr %s771, 4
        %s774 = scalar_lea.vmem [#allocation2], %s773
        %v775 = vld [vmem:[%s774] sm:$0xf]
        %v776 = vld [vmem:[%s3] sm:$0xf]
        %v777 = vld [vmem:[%s3 + $0x4] sm:$0xf]
        %v778 = vld [vmem:[%s3 + $0x8] sm:$0xf]
        %v779 = vld [vmem:[%s3 + $0xc] sm:$0xf]
        %v780 = vld [vmem:[%s4] sm:$0x1]
        %v782 = vlaneseq
        %v783 = vshrl.u32 %v782, 7
        %v784 = vsub.s32 0, %v783
        %v785 = vrot.slane %v780, %v784
        %v791 = vunpack.c.l.b16 %v776
        %v792 = vunpack.c.l.b16 %v777
        %v793 = vunpack.c.l.b16 %v778
        %v794 = vunpack.c.l.b16 %v779
        %v795 = vpack.c.b16 %v792, %v791
        %v796 = vpack.c.b16 %v794, %v793
        %vm799 = vcmask 261120
        %v801 = vsel %vm799, %v775, 0
        %803 = vmatprep.subr.bf16.mxu0 0
        %804 = vmatpush1.bf16.msra.mxu0 %v795
        %805 = vmatprep.subr.bf16.mxu0 0
        %806 = vmatpush1.bf16.msra.mxu0 %v796
        %807 = vmatprep.subr.bf16.mxu0 0
        %808 = vmatpush1.bf16.msra.mxu0 0
        %809 = vmatprep.subr.bf16.mxu0 0
        %810 = vmatpush1.bf16.msra.mxu0 0
        %811 = vmatprep.subr.bf16.mxu0 0
        %812 = vmatpush1.bf16.msra.mxu0 0
        %813 = vmatprep.subr.bf16.mxu0 0
        %814 = vmatpush1.bf16.msra.mxu0 0
        %815 = vmatprep.subr.bf16.mxu0 0
        %816 = vmatpush1.bf16.msra.mxu0 0
        %817 = vmatprep.subr.bf16.mxu0 0
        %818 = vmatpush1.bf16.msra.mxu0 0
        %819 = vmatprep.subr.bf16.mxu0 0
        %820 = vmatpush1.bf16.msra.mxu0 0
        %821 = vmatprep.subr.bf16.mxu0 0
        %822 = vmatpush1.bf16.msra.mxu0 0
        %823 = vmatprep.subr.bf16.mxu0 0
        %824 = vmatpush1.bf16.msra.mxu0 0
        %825 = vmatprep.subr.bf16.mxu0 0
        %826 = vmatpush1.bf16.msra.mxu0 0
        %827 = vmatprep.subr.bf16.mxu0 0
        %828 = vmatpush1.bf16.msra.mxu0 0
        %829 = vmatprep.subr.bf16.mxu0 0
        %830 = vmatpush1.bf16.msra.mxu0 0
        %831 = vmatprep.subr.bf16.mxu0 0
        %832 = vmatpush1.bf16.msra.mxu0 0
        %833 = vmatprep.subr.bf16.mxu0 0
        %834 = vmatpush1.bf16.msra.mxu0 0
        %835 = vmatprep.mubr.bf16.mxu0 0
        %836 = vmatmul.mubr.bf16.gmra.mrb[0].mxu0 %v801
        %v837 = vpop.f32.mrb[0].mxu0
        %v838 = vadd.f32 %v785, %v837
        %v839 = vpop.f32.mrb[0].mxu0
        %v840 = vpop.f32.mrb[0].mxu0
        %v841 = vpop.f32.mrb[0].mxu0
        %842 = vdwg.mxu0
        %v843 = vpack.c.bf16 %v838, %v838
        %v844 = vld [vmem:[#allocation3] sm:$0xf]
        %vm845 = vcmask 64512
        %v847 = vsel %vm845, %v843, 0
        %v850 = vsel %vm845, %v844, 0
        %852 = vmatprep.subr.bf16.mxu0 0
        %853 = vmatpush1.bf16.xpose.msra.mxu0 %v850
        %854 = vmatprep.subr.bf16.mxu0 0
        %855 = vmatpush1.bf16.xpose.msra.mxu0 0
        %856 = vmatprep.subr.bf16.mxu0 0
        %857 = vmatpush1.bf16.xpose.msra.mxu0 0
        %858 = vmatprep.subr.bf16.mxu0 0
        %859 = vmatpush1.bf16.xpose.msra.mxu0 0
        %860 = vmatprep.subr.bf16.mxu0 0
        %861 = vmatpush1.bf16.xpose.msra.mxu0 0
        %862 = vmatprep.subr.bf16.mxu0 0
        %863 = vmatpush1.bf16.xpose.msra.mxu0 0
        %864 = vmatprep.subr.bf16.mxu0 0
        %865 = vmatpush1.bf16.xpose.msra.mxu0 0
        %866 = vmatprep.subr.bf16.mxu0 0
        %867 = vmatpush1.bf16.xpose.msra.mxu0 0
        %868 = vmatprep.subr.bf16.mxu0 0
        %869 = vmatpush1.bf16.xpose.msra.mxu0 0
        %870 = vmatprep.subr.bf16.mxu0 0
        %871 = vmatpush1.bf16.xpose.msra.mxu0 0
        %872 = vmatprep.subr.bf16.mxu0 0
        %873 = vmatpush1.bf16.xpose.msra.mxu0 0
        %874 = vmatprep.subr.bf16.mxu0 0
        %875 = vmatpush1.bf16.xpose.msra.mxu0 0
        %876 = vmatprep.subr.bf16.mxu0 0
        %877 = vmatpush1.bf16.xpose.msra.mxu0 0
        %878 = vmatprep.subr.bf16.mxu0 0
        %879 = vmatpush1.bf16.xpose.msra.mxu0 0
        %880 = vmatprep.subr.bf16.mxu0 0
        %881 = vmatpush1.bf16.xpose.msra.mxu0 0
        %882 = vmatprep.subr.bf16.mxu0 0
        %883 = vmatpush1.bf16.xpose.msra.mxu0 0
        %884 = vmatprep.mubr.bf16.mxu0 0
        %885 = vmatmul.mubr.bf16.gmra.mrb[0].mxu0 %v847
        %v886 = vpop.f32.mrb[0].mxu0
        %v887 = vadd.f32 0.0, %v886
        %v888 = vpop.f32.mrb[0].mxu0
        %v889 = vpop.f32.mrb[0].mxu0
        %v890 = vpop.f32.mrb[0].mxu0
        %891 = vdwg.mxu0
        %v892 = vsel %vm845, %v887, -inf
        %893 = vmax.xlane.f32.xlu0 %v892
        %v894 = vpop.xlane.xlu0 %893
        %v895 = vsub.f32 %v887, %v894
        %v896 = vmul.f32 %v895, 1.442695
        %v897 = vpow.pop %v896
        %v898 = vsel %vm845, %v897, 0.0
        %899 = vadd.xlane.f32.xlu0 %v898
        %v900 = vpop.xlane.xlu0 %899
        %v901 = vrcp.pop %v900
        %v902 = vmul.f32 %v897, %v901
        %v903 = vpack.c.bf16 %v902, %v902
        %v904 = vld [vmem:[#allocation4] sm:$0xf]
        %v906 = vsel %vm845, %v903, 0
        %vm908 = vcmask 1043456
        %v910 = vsel %vm908, %v904, 0
        %912 = vmatprep.subr.bf16.mxu0 0
        %913 = vmatpush1.bf16.msra.mxu0 %v910
        %914 = vmatprep.subr.bf16.mxu0 0
        %915 = vmatpush1.bf16.msra.mxu0 0
        %916 = vmatprep.subr.bf16.mxu0 0
        %917 = vmatpush1.bf16.msra.mxu0 0
        %918 = vmatprep.subr.bf16.mxu0 0
        %919 = vmatpush1.bf16.msra.mxu0 0
        %920 = vmatprep.subr.bf16.mxu0 0
        %921 = vmatpush1.bf16.msra.mxu0 0
        %922 = vmatprep.subr.bf16.mxu0 0
        %923 = vmatpush1.bf16.msra.mxu0 0
        %924 = vmatprep.subr.bf16.mxu0 0
        %925 = vmatpush1.bf16.msra.mxu0 0
        %926 = vmatprep.subr.bf16.mxu0 0
        %927 = vmatpush1.bf16.msra.mxu0 0
        %928 = vmatprep.subr.bf16.mxu0 0
        %929 = vmatpush1.bf16.msra.mxu0 0
        %930 = vmatprep.subr.bf16.mxu0 0
        %931 = vmatpush1.bf16.msra.mxu0 0
        %932 = vmatprep.subr.bf16.mxu0 0
        %933 = vmatpush1.bf16.msra.mxu0 0
        %934 = vmatprep.subr.bf16.mxu0 0
        %935 = vmatpush1.bf16.msra.mxu0 0
        %936 = vmatprep.subr.bf16.mxu0 0
        %937 = vmatpush1.bf16.msra.mxu0 0
        %938 = vmatprep.subr.bf16.mxu0 0
        %939 = vmatpush1.bf16.msra.mxu0 0
        %940 = vmatprep.subr.bf16.mxu0 0
        %941 = vmatpush1.bf16.msra.mxu0 0
        %942 = vmatprep.subr.bf16.mxu0 0
        %943 = vmatpush1.bf16.msra.mxu0 0
        %944 = vmatprep.mubr.bf16.mxu0 0
        %945 = vmatmul.mubr.bf16.gmra.mrb[0].mxu0 %v906
        %v946 = vpop.f32.mrb[0].mxu0
        %v947 = vadd.f32 0.0, %v946
        %v948 = vpop.f32.mrb[0].mxu0
        %v949 = vpop.f32.mrb[0].mxu0
        %v950 = vpop.f32.mrb[0].mxu0
        %951 = vdwg.mxu0
        %952 = vst.msk [vmem:[#allocation5] sm:$0xff] %vm845, %v947
        %s953 = scalar_lea.vmem %s3, 16
        %v954 = vld [vmem:[%s953] sm:$0xf]
        %v955 = vld [vmem:[%s953 + $0x4] sm:$0xf]
        %v956 = vld [vmem:[%s953 + $0x8] sm:$0xf]
        %v957 = vld [vmem:[%s953 + $0xc] sm:$0xf]
        %s958 = scalar_lea.vmem %s4, 1
        %v959 = vld [vmem:[%s958] sm:$0x1]
        %v961 = vlaneseq
        %v962 = vshrl.u32 %v961, 7
        %v963 = vsub.s32 0, %v962
        %v964 = vrot.slane %v959, %v963
        %v970 = vunpack.c.l.b16 %v954
        %v971 = vunpack.c.l.b16 %v955
        %v972 = vunpack.c.l.b16 %v956
        %v973 = vunpack.c.l.b16 %v957
        %v974 = vpack.c.b16 %v971, %v970
        %v975 = vpack.c.b16 %v973, %v972
        %978 = vmatprep.subr.bf16.mxu0 0
        %979 = vmatpush1.bf16.msra.mxu0 %v974
        %980 = vmatprep.subr.bf16.mxu0 0
        %981 = vmatpush1.bf16.msra.mxu0 %v975
        %982 = vmatprep.subr.bf16.mxu0 0
        %983 = vmatpush1.bf16.msra.mxu0 0
        %984 = vmatprep.subr.bf16.mxu0 0
        %985 = vmatpush1.bf16.msra.mxu0 0
        %986 = vmatprep.subr.bf16.mxu0 0
        %987 = vmatpush1.bf16.msra.mxu0 0
        %988 = vmatprep.subr.bf16.mxu0 0
        %989 = vmatpush1.bf16.msra.mxu0 0
        %990 = vmatprep.subr.bf16.mxu0 0
        %991 = vmatpush1.bf16.msra.mxu0 0
        %992 = vmatprep.subr.bf16.mxu0 0
        %993 = vmatpush1.bf16.msra.mxu0 0
        %994 = vmatprep.subr.bf16.mxu0 0
        %995 = vmatpush1.bf16.msra.mxu0 0
        %996 = vmatprep.subr.bf16.mxu0 0
        %997 = vmatpush1.bf16.msra.mxu0 0
        %998 = vmatprep.subr.bf16.mxu0 0
        %999 = vmatpush1.bf16.msra.mxu0 0
        %1000 = vmatprep.subr.bf16.mxu0 0
        %1001 = vmatpush1.bf16.msra.mxu0 0
        %1002 = vmatprep.subr.bf16.mxu0 0
        %1003 = vmatpush1.bf16.msra.mxu0 0
        %1004 = vmatprep.subr.bf16.mxu0 0
        %1005 = vmatpush1.bf16.msra.mxu0 0
        %1006 = vmatprep.subr.bf16.mxu0 0
        %1007 = vmatpush1.bf16.msra.mxu0 0
        %1008 = vmatprep.subr.bf16.mxu0 0
        %1009 = vmatpush1.bf16.msra.mxu0 0
        %1010 = vmatprep.mubr.bf16.mxu0 0
        %1011 = vmatmul.mubr.bf16.gmra.mrb[0].mxu0 %v801
        %v1012 = vpop.f32.mrb[0].mxu0
        %v1013 = vadd.f32 %v964, %v1012
        %v1014 = vpop.f32.mrb[0].mxu0
        %v1015 = vpop.f32.mrb[0].mxu0
        %v1016 = vpop.f32.mrb[0].mxu0
        %1017 = vdwg.mxu0
        %v1018 = vpack.c.bf16 %v1013, %v1013
        %s1019 = scalar_lea.vmem [#allocation3], 4
        %v1020 = vld [vmem:[%s1019] sm:$0xf]
        %v1022 = vsel %vm845, %v1018, 0
        %v1025 = vsel %vm845, %v1020, 0
        %1027 = vmatprep.subr.bf16.mxu0 0
        %1028 = vmatpush1.bf16.xpose.msra.mxu0 %v1025
        %1029 = vmatprep.subr.bf16.mxu0 0
        %1030 = vmatpush1.bf16.xpose.msra.mxu0 0
        %1031 = vmatprep.subr.bf16.mxu0 0
        %1032 = vmatpush1.bf16.xpose.msra.mxu0 0
        %1033 = vmatprep.subr.bf16.mxu0 0
        %1034 = vmatpush1.bf16.xpose.msra.mxu0 0
        %1035 = vmatprep.subr.bf16.mxu0 0
        %1036 = vmatpush1.bf16.xpose.msra.mxu0 0
        %1037 = vmatprep.subr.bf16.mxu0 0
        %1038 = vmatpush1.bf16.xpose.msra.mxu0 0
        %1039 = vmatprep.subr.bf16.mxu0 0
        %1040 = vmatpush1.bf16.xpose.msra.mxu0 0
        %1041 = vmatprep.subr.bf16.mxu0 0
        %1042 = vmatpush1.bf16.xpose.msra.mxu0 0
        %1043 = vmatprep.subr.bf16.mxu0 0
        %1044 = vmatpush1.bf16.xpose.msra.mxu0 0
        %1045 = vmatprep.subr.bf16.mxu0 0
        %1046 = vmatpush1.bf16.xpose.msra.mxu0 0
        %1047 = vmatprep.subr.bf16.mxu0 0
        %1048 = vmatpush1.bf16.xpose.msra.mxu0 0
        %1049 = vmatprep.subr.bf16.mxu0 0
        %1050 = vmatpush1.bf16.xpose.msra.mxu0 0
        %1051 = vmatprep.subr.bf16.mxu0 0
        %1052 = vmatpush1.bf16.xpose.msra.mxu0 0
        %1053 = vmatprep.subr.bf16.mxu0 0
        %1054 = vmatpush1.bf16.xpose.msra.mxu0 0
        %1055 = vmatprep.subr.bf16.mxu0 0
        %1056 = vmatpush1.bf16.xpose.msra.mxu0 0
        %1057 = vmatprep.subr.bf16.mxu0 0
        %1058 = vmatpush1.bf16.xpose.msra.mxu0 0
        %1059 = vmatprep.mubr.bf16.mxu0 0
        %1060 = vmatmul.mubr.bf16.gmra.mrb[0].mxu0 %v1022
        %v1061 = vpop.f32.mrb[0].mxu0
        %v1062 = vadd.f32 0.0, %v1061
        %v1063 = vpop.f32.mrb[0].mxu0
        %v1064 = vpop.f32.mrb[0].mxu0
        %v1065 = vpop.f32.mrb[0].mxu0
        %1066 = vdwg.mxu0
        %v1067 = vsel %vm845, %v1062, -inf
        %1068 = vmax.xlane.f32.xlu0 %v1067
        %v1069 = vpop.xlane.xlu0 %1068
        %v1070 = vsub.f32 %v1062, %v1069
        %v1071 = vmul.f32 %v1070, 1.442695
        %v1072 = vpow.pop %v1071
        %v1073 = vsel %vm845, %v1072, 0.0
        %1074 = vadd.xlane.f32.xlu0 %v1073
        %v1075 = vpop.xlane.xlu0 %1074
        %v1076 = vrcp.pop %v1075
        %v1077 = vmul.f32 %v1072, %v1076
        %v1078 = vpack.c.bf16 %v1077, %v1077
        %s1079 = scalar_lea.vmem [#allocation4], 4
        %v1080 = vld [vmem:[%s1079] sm:$0xf]
        %v1082 = vsel %vm845, %v1078, 0
        %v1085 = vsel %vm908, %v1080, 0
        %1087 = vmatprep.subr.bf16.mxu0 0
        %1088 = vmatpush1.bf16.msra.mxu0 %v1085
        %1089 = vmatprep.subr.bf16.mxu0 0
        %1090 = vmatpush1.bf16.msra.mxu0 0
        %1091 = vmatprep.subr.bf16.mxu0 0
        %1092 = vmatpush1.bf16.msra.mxu0 0
        %1093 = vmatprep.subr.bf16.mxu0 0
        %1094 = vmatpush1.bf16.msra.mxu0 0
        %1095 = vmatprep.subr.bf16.mxu0 0
        %1096 = vmatpush1.bf16.msra.mxu0 0
        %1097 = vmatprep.subr.bf16.mxu0 0
        %1098 = vmatpush1.bf16.msra.mxu0 0
        %1099 = vmatprep.subr.bf16.mxu0 0
        %1100 = vmatpush1.bf16.msra.mxu0 0
        %1101 = vmatprep.subr.bf16.mxu0 0
        %1102 = vmatpush1.bf16.msra.mxu0 0
        %1103 = vmatprep.subr.bf16.mxu0 0
        %1104 = vmatpush1.bf16.msra.mxu0 0
        %1105 = vmatprep.subr.bf16.mxu0 0
        %1106 = vmatpush1.bf16.msra.mxu0 0
        %1107 = vmatprep.subr.bf16.mxu0 0
        %1108 = vmatpush1.bf16.msra.mxu0 0
        %1109 = vmatprep.subr.bf16.mxu0 0
        %1110 = vmatpush1.bf16.msra.mxu0 0
        %1111 = vmatprep.subr.bf16.mxu0 0
        %1112 = vmatpush1.bf16.msra.mxu0 0
        %1113 = vmatprep.subr.bf16.mxu0 0
        %1114 = vmatpush1.bf16.msra.mxu0 0
        %1115 = vmatprep.subr.bf16.mxu0 0
        %1116 = vmatpush1.bf16.msra.mxu0 0
        %1117 = vmatprep.subr.bf16.mxu0 0
        %1118 = vmatpush1.bf16.msra.mxu0 0
        %1119 = vmatprep.mubr.bf16.mxu0 0
        %1120 = vmatmul.mubr.bf16.gmra.mrb[0].mxu0 %v1082
        %v1121 = vpop.f32.mrb[0].mxu0
        %v1122 = vadd.f32 0.0, %v1121
        %v1123 = vpop.f32.mrb[0].mxu0
        %v1124 = vpop.f32.mrb[0].mxu0
        %v1125 = vpop.f32.mrb[0].mxu0
        %1126 = vdwg.mxu0
        %1128 = vrot.lane.b32.xlu0 %v1122, 8
        %v1129 = vpop.permute.xlu0 %1128
        %vm1131 = vcmask 130112
        %1132 = vst.msk [vmem:[#allocation5] sm:$0xff] %vm1131, %v1129
        %s1133 = scalar_lea.vmem %s3, 32
        %v1134 = vld [vmem:[%s1133] sm:$0xf]
        %v1135 = vld [vmem:[%s1133 + $0x4] sm:$0xf]
        %v1136 = vld [vmem:[%s1133 + $0x8] sm:$0xf]
        %v1137 = vld [vmem:[%s1133 + $0xc] sm:$0xf]
        %s1138 = scalar_lea.vmem %s4, 2
        %v1139 = vld [vmem:[%s1138] sm:$0x1]
        %v1141 = vlaneseq
        %v1142 = vshrl.u32 %v1141, 7
        %v1143 = vsub.s32 0, %v1142
        %v1144 = vrot.slane %v1139, %v1143
        %v1150 = vunpack.c.l.b16 %v1134
        %v1151 = vunpack.c.l.b16 %v1135
        %v1152 = vunpack.c.l.b16 %v1136
        %v1153 = vunpack.c.l.b16 %v1137
        %v1154 = vpack.c.b16 %v1151, %v1150
        %v1155 = vpack.c.b16 %v1153, %v1152
        %1158 = vmatprep.subr.bf16.mxu0 0
        %1159 = vmatpush1.bf16.msra.mxu0 %v1154
        %1160 = vmatprep.subr.bf16.mxu0 0
        %1161 = vmatpush1.bf16.msra.mxu0 %v1155
        %1162 = vmatprep.subr.bf16.mxu0 0
        %1163 = vmatpush1.bf16.msra.mxu0 0
        %1164 = vmatprep.subr.bf16.mxu0 0
        %1165 = vmatpush1.bf16.msra.mxu0 0
        %1166 = vmatprep.subr.bf16.mxu0 0
        %1167 = vmatpush1.bf16.msra.mxu0 0
        %1168 = vmatprep.subr.bf16.mxu0 0
        %1169 = vmatpush1.bf16.msra.mxu0 0
        %1170 = vmatprep.subr.bf16.mxu0 0
        %1171 = vmatpush1.bf16.msra.mxu0 0
        %1172 = vmatprep.subr.bf16.mxu0 0
        %1173 = vmatpush1.bf16.msra.mxu0 0
        %1174 = vmatprep.subr.bf16.mxu0 0
        %1175 = vmatpush1.bf16.msra.mxu0 0
        %1176 = vmatprep.subr.bf16.mxu0 0
        %1177 = vmatpush1.bf16.msra.mxu0 0
        %1178 = vmatprep.subr.bf16.mxu0 0
        %1179 = vmatpush1.bf16.msra.mxu0 0
        %1180 = vmatprep.subr.bf16.mxu0 0
        %1181 = vmatpush1.bf16.msra.mxu0 0
        %1182 = vmatprep.subr.bf16.mxu0 0
        %1183 = vmatpush1.bf16.msra.mxu0 0
        %1184 = vmatprep.subr.bf16.mxu0 0
        %1185 = vmatpush1.bf16.msra.mxu0 0
        %1186 = vmatprep.subr.bf16.mxu0 0
        %1187 = vmatpush1.bf16.msra.mxu0 0
        %1188 = vmatprep.subr.bf16.mxu0 0
        %1189 = vmatpush1.bf16.msra.mxu0 0
        %1190 = vmatprep.mubr.bf16.mxu0 0
        %1191 = vmatmul.mubr.bf16.gmra.mrb[0].mxu0 %v801
        %v1192 = vpop.f32.mrb[0].mxu0
        %v1193 = vadd.f32 %v1144, %v1192
        %v1194 = vpop.f32.mrb[0].mxu0
        %v1195 = vpop.f32.mrb[0].mxu0
        %v1196 = vpop.f32.mrb[0].mxu0
        %1197 = vdwg.mxu0
        %v1198 = vpack.c.bf16 %v1193, %v1193
        %s1199 = scalar_lea.vmem [#allocation3], 8
        %v1200 = vld [vmem:[%s1199] sm:$0xf]
        %v1202 = vsel %vm845, %v1198, 0
        %v1205 = vsel %vm845, %v1200, 0
        %1207 = vmatprep.subr.bf16.mxu0 0
        %1208 = vmatpush1.bf16.xpose.msra.mxu0 %v1205
        %1209 = vmatprep.subr.bf16.mxu0 0
        %1210 = vmatpush1.bf16.xpose.msra.mxu0 0
        %1211 = vmatprep.subr.bf16.mxu0 0
        %1212 = vmatpush1.bf16.xpose.msra.mxu0 0
        %1213 = vmatprep.subr.bf16.mxu0 0
        %1214 = vmatpush1.bf16.xpose.msra.mxu0 0
        %1215 = vmatprep.subr.bf16.mxu0 0
        %1216 = vmatpush1.bf16.xpose.msra.mxu0 0
        %1217 = vmatprep.subr.bf16.mxu0 0
        %1218 = vmatpush1.bf16.xpose.msra.mxu0 0
        %1219 = vmatprep.subr.bf16.mxu0 0
        %1220 = vmatpush1.bf16.xpose.msra.mxu0 0
        %1221 = vmatprep.subr.bf16.mxu0 0
        %1222 = vmatpush1.bf16.xpose.msra.mxu0 0
        %1223 = vmatprep.subr.bf16.mxu0 0
        %1224 = vmatpush1.bf16.xpose.msra.mxu0 0
        %1225 = vmatprep.subr.bf16.mxu0 0
        %1226 = vmatpush1.bf16.xpose.msra.mxu0 0
        %1227 = vmatprep.subr.bf16.mxu0 0
        %1228 = vmatpush1.bf16.xpose.msra.mxu0 0
        %1229 = vmatprep.subr.bf16.mxu0 0
        %1230 = vmatpush1.bf16.xpose.msra.mxu0 0
        %1231 = vmatprep.subr.bf16.mxu0 0
        %1232 = vmatpush1.bf16.xpose.msra.mxu0 0
        %1233 = vmatprep.subr.bf16.mxu0 0
        %1234 = vmatpush1.bf16.xpose.msra.mxu0 0
        %1235 = vmatprep.subr.bf16.mxu0 0
        %1236 = vmatpush1.bf16.xpose.msra.mxu0 0
        %1237 = vmatprep.subr.bf16.mxu0 0
        %1238 = vmatpush1.bf16.xpose.msra.mxu0 0
        %1239 = vmatprep.mubr.bf16.mxu0 0
        %1240 = vmatmul.mubr.bf16.gmra.mrb[0].mxu0 %v1202
        %v1241 = vpop.f32.mrb[0].mxu0
        %v1242 = vadd.f32 0.0, %v1241
        %v1243 = vpop.f32.mrb[0].mxu0
        %v1244 = vpop.f32.mrb[0].mxu0
        %v1245 = vpop.f32.mrb[0].mxu0
        %1246 = vdwg.mxu0
        %v1247 = vsel %vm845, %v1242, -inf
        %1248 = vmax.xlane.f32.xlu0 %v1247
        %v1249 = vpop.xlane.xlu0 %1248
        %v1250 = vsub.f32 %v1242, %v1249
        %v1251 = vmul.f32 %v1250, 1.442695
        %v1252 = vpow.pop %v1251
        %v1253 = vsel %vm845, %v1252, 0.0
        %1254 = vadd.xlane.f32.xlu0 %v1253
        %v1255 = vpop.xlane.xlu0 %1254
        %v1256 = vrcp.pop %v1255
        %v1257 = vmul.f32 %v1252, %v1256
        %v1258 = vpack.c.bf16 %v1257, %v1257
        %s1259 = scalar_lea.vmem [#allocation4], 8
        %v1260 = vld [vmem:[%s1259] sm:$0xf]
        %v1262 = vsel %vm845, %v1258, 0
        %v1265 = vsel %vm908, %v1260, 0
        %1267 = vmatprep.subr.bf16.mxu0 0
        %1268 = vmatpush1.bf16.msra.mxu0 %v1265
        %1269 = vmatprep.subr.bf16.mxu0 0
        %1270 = vmatpush1.bf16.msra.mxu0 0
        %1271 = vmatprep.subr.bf16.mxu0 0
        %1272 = vmatpush1.bf16.msra.mxu0 0
        %1273 = vmatprep.subr.bf16.mxu0 0
        %1274 = vmatpush1.bf16.msra.mxu0 0
        %1275 = vmatprep.subr.bf16.mxu0 0
        %1276 = vmatpush1.bf16.msra.mxu0 0
        %1277 = vmatprep.subr.bf16.mxu0 0
        %1278 = vmatpush1.bf16.msra.mxu0 0
        %1279 = vmatprep.subr.bf16.mxu0 0
        %1280 = vmatpush1.bf16.msra.mxu0 0
        %1281 = vmatprep.subr.bf16.mxu0 0
        %1282 = vmatpush1.bf16.msra.mxu0 0
        %1283 = vmatprep.subr.bf16.mxu0 0
        %1284 = vmatpush1.bf16.msra.mxu0 0
        %1285 = vmatprep.subr.bf16.mxu0 0
        %1286 = vmatpush1.bf16.msra.mxu0 0
        %1287 = vmatprep.subr.bf16.mxu0 0
        %1288 = vmatpush1.bf16.msra.mxu0 0
        %1289 = vmatprep.subr.bf16.mxu0 0
        %1290 = vmatpush1.bf16.msra.mxu0 0
        %1291 = vmatprep.subr.bf16.mxu0 0
        %1292 = vmatpush1.bf16.msra.mxu0 0
        %1293 = vmatprep.subr.bf16.mxu0 0
        %1294 = vmatpush1.bf16.msra.mxu0 0
        %1295 = vmatprep.subr.bf16.mxu0 0
        %1296 = vmatpush1.bf16.msra.mxu0 0
        %1297 = vmatprep.subr.bf16.mxu0 0
        %1298 = vmatpush1.bf16.msra.mxu0 0
        %1299 = vmatprep.mubr.bf16.mxu0 0
        %1300 = vmatmul.mubr.bf16.gmra.mrb[0].mxu0 %v1262
        %v1301 = vpop.f32.mrb[0].mxu0
        %v1302 = vadd.f32 0.0, %v1301
        %v1303 = vpop.f32.mrb[0].mxu0
        %v1304 = vpop.f32.mrb[0].mxu0
        %v1305 = vpop.f32.mrb[0].mxu0
        %1306 = vdwg.mxu0
        %1308 = vrot.lane.b32.xlu0 %v1302, 16
        %v1309 = vpop.permute.xlu0 %1308
        %vm1311 = vcmask 195712
        %1312 = vst.msk [vmem:[#allocation5] sm:$0xff] %vm1311, %v1309
        %s1313 = scalar_lea.vmem %s3, 48
        %v1314 = vld [vmem:[%s1313] sm:$0xf]
        %v1315 = vld [vmem:[%s1313 + $0x4] sm:$0xf]
        %v1316 = vld [vmem:[%s1313 + $0x8] sm:$0xf]
        %v1317 = vld [vmem:[%s1313 + $0xc] sm:$0xf]
        %s1318 = scalar_lea.vmem %s4, 3
        %v1319 = vld [vmem:[%s1318] sm:$0x1]
        %v1321 = vlaneseq
        %v1322 = vshrl.u32 %v1321, 7
        %v1323 = vsub.s32 0, %v1322
        %v1324 = vrot.slane %v1319, %v1323
        %v1330 = vunpack.c.l.b16 %v1314
        %v1331 = vunpack.c.l.b16 %v1315
        %v1332 = vunpack.c.l.b16 %v1316
        %v1333 = vunpack.c.l.b16 %v1317
        %v1334 = vpack.c.b16 %v1331, %v1330
        %v1335 = vpack.c.b16 %v1333, %v1332
        %1338 = vmatprep.subr.bf16.mxu0 0
        %1339 = vmatpush1.bf16.msra.mxu0 %v1334
        %1340 = vmatprep.subr.bf16.mxu0 0
        %1341 = vmatpush1.bf16.msra.mxu0 %v1335
        %1342 = vmatprep.subr.bf16.mxu0 0
        %1343 = vmatpush1.bf16.msra.mxu0 0
        %1344 = vmatprep.subr.bf16.mxu0 0
        %1345 = vmatpush1.bf16.msra.mxu0 0
        %1346 = vmatprep.subr.bf16.mxu0 0
        %1347 = vmatpush1.bf16.msra.mxu0 0
        %1348 = vmatprep.subr.bf16.mxu0 0
        %1349 = vmatpush1.bf16.msra.mxu0 0
        %1350 = vmatprep.subr.bf16.mxu0 0
        %1351 = vmatpush1.bf16.msra.mxu0 0
        %1352 = vmatprep.subr.bf16.mxu0 0
        %1353 = vmatpush1.bf16.msra.mxu0 0
        %1354 = vmatprep.subr.bf16.mxu0 0
        %1355 = vmatpush1.bf16.msra.mxu0 0
        %1356 = vmatprep.subr.bf16.mxu0 0
        %1357 = vmatpush1.bf16.msra.mxu0 0
        %1358 = vmatprep.subr.bf16.mxu0 0
        %1359 = vmatpush1.bf16.msra.mxu0 0
        %1360 = vmatprep.subr.bf16.mxu0 0
        %1361 = vmatpush1.bf16.msra.mxu0 0
        %1362 = vmatprep.subr.bf16.mxu0 0
        %1363 = vmatpush1.bf16.msra.mxu0 0
        %1364 = vmatprep.subr.bf16.mxu0 0
        %1365 = vmatpush1.bf16.msra.mxu0 0
        %1366 = vmatprep.subr.bf16.mxu0 0
        %1367 = vmatpush1.bf16.msra.mxu0 0
        %1368 = vmatprep.subr.bf16.mxu0 0
        %1369 = vmatpush1.bf16.msra.mxu0 0
        %1370 = vmatprep.mubr.bf16.mxu0 0
        %1371 = vmatmul.mubr.bf16.gmra.mrb[0].mxu0 %v801
        %v1372 = vpop.f32.mrb[0].mxu0
        %v1373 = vadd.f32 %v1324, %v1372
        %v1374 = vpop.f32.mrb[0].mxu0
        %v1375 = vpop.f32.mrb[0].mxu0
        %v1376 = vpop.f32.mrb[0].mxu0
        %1377 = vdwg.mxu0
        %v1378 = vpack.c.bf16 %v1373, %v1373
        %s1379 = scalar_lea.vmem [#allocation3], 12
        %v1380 = vld [vmem:[%s1379] sm:$0xf]
        %v1382 = vsel %vm845, %v1378, 0
        %v1385 = vsel %vm845, %v1380, 0
        %1387 = vmatprep.subr.bf16.mxu0 0
        %1388 = vmatpush1.bf16.xpose.msra.mxu0 %v1385
        %1389 = vmatprep.subr.bf16.mxu0 0
        %1390 = vmatpush1.bf16.xpose.msra.mxu0 0
        %1391 = vmatprep.subr.bf16.mxu0 0
        %1392 = vmatpush1.bf16.xpose.msra.mxu0 0
        %1393 = vmatprep.subr.bf16.mxu0 0
        %1394 = vmatpush1.bf16.xpose.msra.mxu0 0
        %1395 = vmatprep.subr.bf16.mxu0 0
        %1396 = vmatpush1.bf16.xpose.msra.mxu0 0
        %1397 = vmatprep.subr.bf16.mxu0 0
        %1398 = vmatpush1.bf16.xpose.msra.mxu0 0
        %1399 = vmatprep.subr.bf16.mxu0 0
        %1400 = vmatpush1.bf16.xpose.msra.mxu0 0
        %1401 = vmatprep.subr.bf16.mxu0 0
        %1402 = vmatpush1.bf16.xpose.msra.mxu0 0
        %1403 = vmatprep.subr.bf16.mxu0 0
        %1404 = vmatpush1.bf16.xpose.msra.mxu0 0
        %1405 = vmatprep.subr.bf16.mxu0 0
        %1406 = vmatpush1.bf16.xpose.msra.mxu0 0
        %1407 = vmatprep.subr.bf16.mxu0 0
        %1408 = vmatpush1.bf16.xpose.msra.mxu0 0
        %1409 = vmatprep.subr.bf16.mxu0 0
        %1410 = vmatpush1.bf16.xpose.msra.mxu0 0
        %1411 = vmatprep.subr.bf16.mxu0 0
        %1412 = vmatpush1.bf16.xpose.msra.mxu0 0
        %1413 = vmatprep.subr.bf16.mxu0 0
        %1414 = vmatpush1.bf16.xpose.msra.mxu0 0
        %1415 = vmatprep.subr.bf16.mxu0 0
        %1416 = vmatpush1.bf16.xpose.msra.mxu0 0
        %1417 = vmatprep.subr.bf16.mxu0 0
        %1418 = vmatpush1.bf16.xpose.msra.mxu0 0
        %1419 = vmatprep.mubr.bf16.mxu0 0
        %1420 = vmatmul.mubr.bf16.gmra.mrb[0].mxu0 %v1382
        %v1421 = vpop.f32.mrb[0].mxu0
        %v1422 = vadd.f32 0.0, %v1421
        %v1423 = vpop.f32.mrb[0].mxu0
        %v1424 = vpop.f32.mrb[0].mxu0
        %v1425 = vpop.f32.mrb[0].mxu0
        %1426 = vdwg.mxu0
        %v1427 = vsel %vm845, %v1422, -inf
        %1428 = vmax.xlane.f32.xlu0 %v1427
        %v1429 = vpop.xlane.xlu0 %1428
        %v1430 = vsub.f32 %v1422, %v1429
        %v1431 = vmul.f32 %v1430, 1.442695
        %v1432 = vpow.pop %v1431
        %v1433 = vsel %vm845, %v1432, 0.0
        %1434 = vadd.xlane.f32.xlu0 %v1433
        %v1435 = vpop.xlane.xlu0 %1434
        %v1436 = vrcp.pop %v1435
        %v1437 = vmul.f32 %v1432, %v1436
        %v1438 = vpack.c.bf16 %v1437, %v1437
        %s1439 = scalar_lea.vmem [#allocation4], 12
        %v1440 = vld [vmem:[%s1439] sm:$0xf]
        %v1442 = vsel %vm845, %v1438, 0
        %v1445 = vsel %vm908, %v1440, 0
        %1447 = vmatprep.subr.bf16.mxu0 0
        %1448 = vmatpush1.bf16.msra.mxu0 %v1445
        %1449 = vmatprep.subr.bf16.mxu0 0
        %1450 = vmatpush1.bf16.msra.mxu0 0
        %1451 = vmatprep.subr.bf16.mxu0 0
        %1452 = vmatpush1.bf16.msra.mxu0 0
        %1453 = vmatprep.subr.bf16.mxu0 0
        %1454 = vmatpush1.bf16.msra.mxu0 0
        %1455 = vmatprep.subr.bf16.mxu0 0
        %1456 = vmatpush1.bf16.msra.mxu0 0
        %1457 = vmatprep.subr.bf16.mxu0 0
        %1458 = vmatpush1.bf16.msra.mxu0 0
        %1459 = vmatprep.subr.bf16.mxu0 0
        %1460 = vmatpush1.bf16.msra.mxu0 0
        %1461 = vmatprep.subr.bf16.mxu0 0
        %1462 = vmatpush1.bf16.msra.mxu0 0
        %1463 = vmatprep.subr.bf16.mxu0 0
        %1464 = vmatpush1.bf16.msra.mxu0 0
        %1465 = vmatprep.subr.bf16.mxu0 0
        %1466 = vmatpush1.bf16.msra.mxu0 0
        %1467 = vmatprep.subr.bf16.mxu0 0
        %1468 = vmatpush1.bf16.msra.mxu0 0
        %1469 = vmatprep.subr.bf16.mxu0 0
        %1470 = vmatpush1.bf16.msra.mxu0 0
        %1471 = vmatprep.subr.bf16.mxu0 0
        %1472 = vmatpush1.bf16.msra.mxu0 0
        %1473 = vmatprep.subr.bf16.mxu0 0
        %1474 = vmatpush1.bf16.msra.mxu0 0
        %1475 = vmatprep.subr.bf16.mxu0 0
        %1476 = vmatpush1.bf16.msra.mxu0 0
        %1477 = vmatprep.subr.bf16.mxu0 0
        %1478 = vmatpush1.bf16.msra.mxu0 0
        %1479 = vmatprep.mubr.bf16.mxu0 0
        %1480 = vmatmul.mubr.bf16.gmra.mrb[0].mxu0 %v1442
        %v1481 = vpop.f32.mrb[0].mxu0
        %v1482 = vadd.f32 0.0, %v1481
        %v1483 = vpop.f32.mrb[0].mxu0
        %v1484 = vpop.f32.mrb[0].mxu0
        %v1485 = vpop.f32.mrb[0].mxu0
        %1486 = vdwg.mxu0
        %1488 = vrot.lane.b32.xlu0 %v1482, 24
        %v1489 = vpop.permute.xlu0 %1488
        %vm1491 = vcmask 261312
        %1492 = vst.msk [vmem:[#allocation5] sm:$0xff] %vm1491, %v1489
        %v1493 = vld [vmem:[#allocation5] sm:$0xff]
        %v1494 = vadd.f32 %v770, %v1493
        %v1495 = vld [vmem:[%s9] sm:$0x1]
        %v1496 = vld [vmem:[%s10] sm:$0x1]
        %v1497 = vsel %vm799, %v1494, 0.0
        %1498 = vadd.xlane.f32.xlu0 %v1497
        %v1499 = vpop.xlane.xlu0 %1498
        %v1500 = vrcp.pop 32.0
        %v1501 = vmul.f32 %v1499, %v1500
        %v1502 = vsub.f32 %v1494, %v1501
        %v1503 = vmul.f32 %v1502, %v1502
        %v1504 = vsel %vm799, %v1503, 0.0
        %1505 = vadd.xlane.f32.xlu0 %v1504
        %v1506 = vpop.xlane.xlu0 %1505
        %v1507 = vmul.f32 %v1506, %v1500
        %v1508 = vadd.f32 %v1507, 1e-05
        %v1509 = vrsqrt.pop %v1508
        %v1510 = vmul.f32 %v1502, %v1509
        %v1512 = vlaneseq
        %v1513 = vshrl.u32 %v1512, 7
        %v1514 = vsub.s32 0, %v1513
        %v1515 = vrot.slane %v1495, %v1514
        %v1517 = vmul.f32 %v1510, %v1515
        %v1519 = vlaneseq
        %v1520 = vshrl.u32 %v1519, 7
        %v1521 = vsub.s32 0, %v1520
        %v1522 = vrot.slane %v1496, %v1521
        %v1524 = vadd.f32 %v1517, %v1522
        %v1525 = vpack.c.bf16 %v1524, %v1524
        %v1526 = vld [vmem:[%s11] sm:$0xf]
        %v1527 = vld [vmem:[%s11 + $0x4] sm:$0xf]
        %v1528 = vld [vmem:[%s11 + $0x8] sm:$0xf]
        %v1529 = vld [vmem:[%s11 + $0xc] sm:$0xf]
        %v1530 = vld [vmem:[%s12] sm:$0x1]
        %v1532 = vlaneseq
        %v1533 = vshrl.u32 %v1532, 7
        %v1534 = vsub.s32 0, %v1533
        %v1535 = vrot.slane %v1530, %v1534
        %v1541 = vunpack.c.l.b16 %v1526
        %v1542 = vunpack.c.l.b16 %v1527
        %v1543 = vunpack.c.l.b16 %v1528
        %v1544 = vunpack.c.l.b16 %v1529
        %v1545 = vpack.c.b16 %v1542, %v1541
        %v1546 = vpack.c.b16 %v1544, %v1543
        %v1550 = vsel %vm799, %v1525, 0
        %1552 = vmatprep.subr.bf16.mxu0 0
        %1553 = vmatpush1.bf16.msra.mxu0 %v1545
        %1554 = vmatprep.subr.bf16.mxu0 0
        %1555 = vmatpush1.bf16.msra.mxu0 %v1546
        %1556 = vmatprep.subr.bf16.mxu0 0
        %1557 = vmatpush1.bf16.msra.mxu0 0
        %1558 = vmatprep.subr.bf16.mxu0 0
        %1559 = vmatpush1.bf16.msra.mxu0 0
        %1560 = vmatprep.subr.bf16.mxu0 0
        %1561 = vmatpush1.bf16.msra.mxu0 0
        %1562 = vmatprep.subr.bf16.mxu0 0
        %1563 = vmatpush1.bf16.msra.mxu0 0
        %1564 = vmatprep.subr.bf16.mxu0 0
        %1565 = vmatpush1.bf16.msra.mxu0 0
        %1566 = vmatprep.subr.bf16.mxu0 0
        %1567 = vmatpush1.bf16.msra.mxu0 0
        %1568 = vmatprep.subr.bf16.mxu0 0
        %1569 = vmatpush1.bf16.msra.mxu0 0
        %1570 = vmatprep.subr.bf16.mxu0 0
        %1571 = vmatpush1.bf16.msra.mxu0 0
        %1572 = vmatprep.subr.bf16.mxu0 0
        %1573 = vmatpush1.bf16.msra.mxu0 0
        %1574 = vmatprep.subr.bf16.mxu0 0
        %1575 = vmatpush1.bf16.msra.mxu0 0
        %1576 = vmatprep.subr.bf16.mxu0 0
        %1577 = vmatpush1.bf16.msra.mxu0 0
        %1578 = vmatprep.subr.bf16.mxu0 0
        %1579 = vmatpush1.bf16.msra.mxu0 0
        %1580 = vmatprep.subr.bf16.mxu0 0
        %1581 = vmatpush1.bf16.msra.mxu0 0
        %1582 = vmatprep.subr.bf16.mxu0 0
        %1583 = vmatpush1.bf16.msra.mxu0 0
        %1584 = vmatprep.mubr.bf16.mxu0 0
        %1585 = vmatmul.mubr.bf16.gmra.mrb[0].mxu0 %v1550
        %v1586 = vpop.f32.mrb[0].mxu0
        %v1587 = vadd.f32 %v1535, %v1586
        %v1588 = vpop.f32.mrb[0].mxu0
        %v1589 = vpop.f32.mrb[0].mxu0
        %v1590 = vpop.f32.mrb[0].mxu0
        %1591 = vdwg.mxu0
        %v1592 = vld [vmem:[%s13] sm:$0x1]
        %v1593 = vld [vmem:[%s14] sm:$0x1]
        %vm1594 = vcmask 523264
        %v1595 = vsel %vm1594, %v1587, 0.0
        %1596 = vadd.xlane.f32.xlu0 %v1595
        %v1597 = vpop.xlane.xlu0 %1596
        %v1598 = vrcp.pop 64.0
        %v1599 = vmul.f32 %v1597, %v1598
        %v1600 = vsub.f32 %v1587, %v1599
        %v1601 = vmul.f32 %v1600, %v1600
        %v1602 = vsel %vm1594, %v1601, 0.0
        %1603 = vadd.xlane.f32.xlu0 %v1602
        %v1604 = vpop.xlane.xlu0 %1603
        %v1605 = vmul.f32 %v1604, %v1598
        %v1606 = vadd.f32 %v1605, 1e-05
        %v1607 = vrsqrt.pop %v1606
        %v1608 = vmul.f32 %v1600, %v1607
        %v1610 = vlaneseq
        %v1611 = vshrl.u32 %v1610, 7
        %v1612 = vsub.s32 0, %v1611
        %v1613 = vrot.slane %v1592, %v1612
        %v1615 = vmul.f32 %v1608, %v1613
        %v1617 = vlaneseq
        %v1618 = vshrl.u32 %v1617, 7
        %v1619 = vsub.s32 0, %v1618
        %v1620 = vrot.slane %v1593, %v1619
        %v1622 = vadd.f32 %v1615, %v1620
        %v1623 = vmax.f32 %v1622, 0.0
        %v1624 = vpack.c.bf16 %v1623, %v1623
        %v1625 = vld [vmem:[%s15] sm:$0xf]
        %v1626 = vld [vmem:[%s15 + $0x4] sm:$0xf]
        %v1627 = vld [vmem:[%s15 + $0x8] sm:$0xf]
        %v1628 = vld [vmem:[%s15 + $0xc] sm:$0xf]
        %v1629 = vld [vmem:[%s15 + $0x10] sm:$0xf]
        %v1630 = vld [vmem:[%s15 + $0x14] sm:$0xf]
        %v1631 = vld [vmem:[%s15 + $0x18] sm:$0xf]
        %v1632 = vld [vmem:[%s15 + $0x1c] sm:$0xf]
        %v1633 = vld [vmem:[%s16] sm:$0x1]
        %v1635 = vlaneseq
        %v1636 = vshrl.u32 %v1635, 7
        %v1637 = vsub.s32 0, %v1636
        %v1638 = vrot.slane %v1633, %v1637
        %v1648 = vunpack.c.l.b16 %v1625
        %v1649 = vunpack.c.l.b16 %v1626
        %v1650 = vunpack.c.l.b16 %v1627
        %v1651 = vunpack.c.l.b16 %v1628
        %v1652 = vunpack.c.l.b16 %v1629
        %v1653 = vunpack.c.l.b16 %v1630
        %v1654 = vunpack.c.l.b16 %v1631
        %v1655 = vunpack.c.l.b16 %v1632
        %v1656 = vpack.c.b16 %v1649, %v1648
        %v1657 = vpack.c.b16 %v1651, %v1650
        %v1658 = vpack.c.b16 %v1653, %v1652
        %v1659 = vpack.c.b16 %v1655, %v1654
        %v1665 = vsel %vm1594, %v1624, 0
        %1667 = vmatprep.subr.bf16.mxu0 0
        %1668 = vmatpush1.bf16.msra.mxu0 %v1656
        %1669 = vmatprep.subr.bf16.mxu0 0
        %1670 = vmatpush1.bf16.msra.mxu0 %v1657
        %1671 = vmatprep.subr.bf16.mxu0 0
        %1672 = vmatpush1.bf16.msra.mxu0 %v1658
        %1673 = vmatprep.subr.bf16.mxu0 0
        %1674 = vmatpush1.bf16.msra.mxu0 %v1659
        %1675 = vmatprep.subr.bf16.mxu0 0
        %1676 = vmatpush1.bf16.msra.mxu0 0
        %1677 = vmatprep.subr.bf16.mxu0 0
        %1678 = vmatpush1.bf16.msra.mxu0 0
        %1679 = vmatprep.subr.bf16.mxu0 0
        %1680 = vmatpush1.bf16.msra.mxu0 0
        %1681 = vmatprep.subr.bf16.mxu0 0
        %1682 = vmatpush1.bf16.msra.mxu0 0
        %1683 = vmatprep.subr.bf16.mxu0 0
        %1684 = vmatpush1.bf16.msra.mxu0 0
        %1685 = vmatprep.subr.bf16.mxu0 0
        %1686 = vmatpush1.bf16.msra.mxu0 0
        %1687 = vmatprep.subr.bf16.mxu0 0
        %1688 = vmatpush1.bf16.msra.mxu0 0
        %1689 = vmatprep.subr.bf16.mxu0 0
        %1690 = vmatpush1.bf16.msra.mxu0 0
        %1691 = vmatprep.subr.bf16.mxu0 0
        %1692 = vmatpush1.bf16.msra.mxu0 0
        %1693 = vmatprep.subr.bf16.mxu0 0
        %1694 = vmatpush1.bf16.msra.mxu0 0
        %1695 = vmatprep.subr.bf16.mxu0 0
        %1696 = vmatpush1.bf16.msra.mxu0 0
        %1697 = vmatprep.subr.bf16.mxu0 0
        %1698 = vmatpush1.bf16.msra.mxu0 0
        %1699 = vmatprep.mubr.bf16.mxu0 0
        %1700 = vmatmul.mubr.bf16.gmra.mrb[0].mxu0 %v1665
        %v1701 = vpop.f32.mrb[0].mxu0
        %v1702 = vadd.f32 %v1638, %v1701
        %v1703 = vpop.f32.mrb[0].mxu0
        %v1704 = vpop.f32.mrb[0].mxu0
        %v1705 = vpop.f32.mrb[0].mxu0
        %1706 = vdwg.mxu0
        %1707 = vst.msk [vmem:[%s553] sm:$0xff] %vm799, %v1702
        %s1708 = sand.u32 %s415, 1
        %s1709 = scalar_lea.sflag [#allocation7], %s1708
        %s1710 = sand.u32 %s415, 1
        %s1711 = smul.addr %s1710, 8
        %s1712 = scalar_lea.vmem [#allocation6], %s1711
        // Predicated region
        $region93: #{tpu_custom_call.1} parent=87 // pred_check
          %p1713 = pneg %p425
        $region94: #{tpu_custom_call.1} parent=87 // pred_check_branch
          %1715 = sbr.rel (%p1713) target = $region96
        $region95: #{tpu_custom_call.1} parent=87 // pred_region
          %s1717 = ssub.s32 128, 128
          %1718 = vsyncadd %s1709, %s1717
          %s1719 = sadd.s32 %s36, %s35
          %s1720 = smul.addr %s1719, 128
          %s1721 = scalar_lea.hbm %s17, %s1720
          %s1723 = sshll.u32 %s1712, 4
          %s1724 = int_to_ptr.vmem [resolvable:$true] %s1723
          %1726 = dma.vmem_to_hbm [thread:$0]  %s1724, 128, %s1721, %s1709
        $region96: #{tpu_custom_call.1} parent=87 // pred_fallthru
          _
      $region88: #{tpu_custom_call.1} parent=5 // pred_fallthru
        _
      %p1727 = scmp.le.s32.totalorder 2, %s26
      // Predicated region
      $region97: #{tpu_custom_call.1} parent=5 // pred_check
        %p1728 = pneg %p1727
      $region98: #{tpu_custom_call.1} parent=5 // pred_check_branch
        %1730 = sbr.rel (%p1728) target = $region100
      $region99: #{tpu_custom_call.1} parent=5 // pred_region
        %s1731 = ssub.s32 %s26, 2
        // Predicated region
        $region101: #{tpu_custom_call.1} parent=99 // pred_check
          %p1732 = pneg %p431
        $region102: #{tpu_custom_call.1} parent=99 // pred_check_branch
          %1734 = sbr.rel (%p1732) target = $region104
        $region103: #{tpu_custom_call.1} parent=99 // pred_region
          %s1735 = sand.u32 %s416, 1
          %s1736 = scalar_lea.sflag [#allocation7], %s1735
          %s1737 = sand.u32 %s416, 1
          %s1738 = smul.addr %s1737, 8
          %s1739 = scalar_lea.vmem [#allocation6], %s1738
          %1740 = dma.done %s1736, 128
        $region104: #{tpu_custom_call.1} parent=99 // pred_fallthru
          _
      $region100: #{tpu_custom_call.1} parent=5 // pred_fallthru
        _
    $region6: #{tpu_custom_call.1} parent=1 // loop_footer
      %s30 = sadd.s32 1, %s26
    $region7: #{tpu_custom_call.1} parent=1 // loop_footer_branch
      %25 = sbr.rel target = $region3
    $region8: #{tpu_custom_call.1} parent=1 // loop_exit
      _
    %1741 = vsyncpa [#allocation7], 1
    %s1742 = scalar_lea.sflag [#allocation7], 1
    %1743 = vsyncpa %s1742, 1

</llo_original>
